<compile_context>
chip_gen: v6e
topology: v6e:2x2x1
jax: 0.10.0
libtpu: 0.0.40
codegen_flags: <defaults>
</compile_context>

<pallas_src>
import jax
import jax.numpy as jnp
from jax import lax
from jax.experimental import pallas as pl
from jax.experimental.pallas import tpu as pltpu


# --------------------------------------------------------------------------
# Fused Word_atten kernel: one grid step == one batch element.
# --------------------------------------------------------------------------
def make_word_atten_kernel(H, W, C, outf, PAD):
    HW = H * W

    def kernel(imf_ref, w12_ref, wf_ref, o_ref, xflat_ref, patch_ref):
        # imf_ref  : (C, HW)           bf16, channel-major flattened image
        # w12_ref  : (2*outf, 9*C)     bf16, fused [conv1; conv2] weight,
        #                              k = (dy*3+dx)*C + c on the lane axis
        # wf_ref   : (outf, L)         f32 word features (this batch element)
        # o_ref    : (outf, L)         f32 output
        # xflat_ref: (C, PAD+HW+PAD)   bf16 scratch, zero borders
        # patch_ref: (9*C, HW)         bf16 scratch, transposed im2col
        zero_border = jnp.zeros((C, PAD), dtype=xflat_ref.dtype)
        xflat_ref[:, 0:PAD] = zero_border                      # lane-aligned
        xflat_ref[:, PAD + HW:PAD + HW + PAD] = zero_border    # lane-aligned
        xflat_ref[:, PAD:PAD + HW] = imf_ref[...]              # lane-aligned

        # x-edge masks over the flattened q axis (lane axis).
        x_idx = lax.broadcasted_iota(jnp.int32, (1, HW), 1) % W
        not_left = x_idx != 0            # invalid read when dx == 0 and x == 0
        not_right = x_idx != (W - 1)     # invalid read when dx == 2 and x == W-1

        # Transposed im2col: patch[(dy*3+dx)*C + c, q] = padded_img[c, y+dy-1, x+dx-1]
        for dy in range(3):
            for dx in range(3):
                t = dy * 3 + dx
                s = (dy - 1) * W + (dx - 1)
                tap = xflat_ref[:, PAD + s:PAD + s + HW]        # (C, HW) lane-shifted load
                if dx == 0:
                    tap = jnp.where(not_left, tap, jnp.zeros_like(tap))
                elif dx == 2:
                    tap = jnp.where(not_right, tap, jnp.zeros_like(tap))
                patch_ref[t * C:(t + 1) * C, :] = tap           # sublane-aligned store

        # ---- both convs as ONE MXU matmul: (2*outf, 9C) @ (9C, HW) ----------
        h12 = jnp.dot(w12_ref[...], patch_ref[...],
                      preferred_element_type=jnp.float32)       # (2*outf, HW) f32
        h1 = h12[:outf, :].astype(jnp.bfloat16)                 # == torch h1_1 (outf, HW)
        h2 = h12[outf:, :].astype(jnp.bfloat16)                 # == torch h2_1 (outf, HW)

        # ---- S = bmm(h1_1, h2_1^T):  S[i, j] = sum_q h1[i, q] * h2[j, q] ----
        s = lax.dot_general(h1, h2, (((1,), (1,)), ((), ())),
                            preferred_element_type=jnp.float32)  # (outf, outf)

        # ---- softmax over torch dim=1 (the i axis == axis 0 here) ----------
        s = s - jnp.max(s, axis=0, keepdims=True)
        es = jnp.exp(s)
        weight = es * pl.reciprocal(jnp.sum(es, axis=0, keepdims=True), approx=True)

        # ---- A = bmm(weight, wf): canonical matmul, bf16 ops, f32 acc ------
        wf = wf_ref[...]                                         # (outf, L) f32
        a = jnp.dot(weight.astype(jnp.bfloat16), wf.astype(jnp.bfloat16),
                    preferred_element_type=jnp.float32)          # (outf, L)

        # ---- softmax over torch dim=1 (axis 0) ------------------------------
        a = a - jnp.max(a, axis=0, keepdims=True)
        ea = jnp.exp(a)
        iawf = ea * pl.reciprocal(jnp.sum(ea, axis=0, keepdims=True), approx=True)

        # ---- AdaptiveAvgPool2d((1, L)) == mean over the outf axis ----------
        wei = jnp.sum(iawf, axis=0, keepdims=True) * (1.0 / outf)  # (1, L)

        # ---- out = wei * wf  (lane-dense (outf, L) store) -------------------
        o_ref[...] = wei * wf

    return kernel


# --------------------------------------------------------------------------
# Wrapper: accepts torch-convention tensors, ONE pallas_call for the module.
# --------------------------------------------------------------------------
def word_atten(imf_nchw, wf, conv1_w_oihw, conv2_w_oihw):
    """Word_atten.forward.  imf: (B, ngf, H, W) NCHW; wf: (B, outf, L);
    conv weights in torch OIHW layout (outf, ngf, 3, 3)."""
    B, C, H, W = imf_nchw.shape
    outf = conv1_w_oihw.shape[0]
    L = wf.shape[-1]
    HW = H * W
    assert wf.shape == (B, outf, L)

    PAD = 128                      # zero border: >= W+2 and a multiple of 128
    assert PAD >= W + 2 and PAD % 128 == 0

    # NCHW is already channel-major: flattening to (B, C, HW) is free.
    imf_flat = imf_nchw.reshape(B, C, HW).astype(jnp.bfloat16)

    # OIHW -> (outf, 9C) with k = (dy*3+dx)*C + c; stack conv1/conv2 -> (2*outf, 9C).
    def prep(w_oihw):
        return jnp.transpose(w_oihw, (0, 2, 3, 1)).reshape(outf, 9 * C)
    w12 = jnp.concatenate([prep(conv1_w_oihw), prep(conv2_w_oihw)],
                          axis=0).astype(jnp.bfloat16)          # (2*outf, 9*C)

    kernel = make_word_atten_kernel(H, W, C, outf, PAD)

    return pl.pallas_call(
        kernel,
        out_shape=jax.ShapeDtypeStruct((B, outf, L), jnp.float32),
        grid=(B,),
        in_specs=[
            pl.BlockSpec((None, C, HW), lambda b: (b, 0, 0)),
            pl.BlockSpec((2 * outf, 9 * C), lambda b: (0, 0)),
            pl.BlockSpec((None, outf, L), lambda b: (b, 0, 0)),
        ],
        out_specs=pl.BlockSpec((None, outf, L), lambda b: (b, 0, 0)),
        scratch_shapes=[
            pltpu.VMEM((C, 2 * PAD + HW), jnp.bfloat16),   # zero-bordered flat image
            pltpu.VMEM((9 * C, HW), jnp.bfloat16),         # transposed im2col
        ],
        compiler_params=pltpu.CompilerParams(
            dimension_semantics=("parallel",),   # B steps -> both TCs on v7x
        ),
    )(imf_flat, w12, wf)


# --------------------------------------------------------------------------
# Pure-JAX reference (mirrors the torch module) for a correctness check.
# --------------------------------------------------------------------------
def word_atten_reference(imf, wf, w1_oihw, w2_oihw):
    h1 = lax.conv_general_dilated(imf, w1_oihw, (1, 1), "SAME",
                                  dimension_numbers=("NCHW", "OIHW", "NCHW"))
    h2 = lax.conv_general_dilated(imf, w2_oihw, (1, 1), "SAME",
                                  dimension_numbers=("NCHW", "OIHW", "NCHW"))
    B, outf = h1.shape[0], h1.shape[1]
    hw = h1.shape[2] * h1.shape[3]
    h1 = h1.reshape(B, outf, hw)
    h2 = h2.reshape(B, outf, hw)
    s = jnp.einsum("biq,bjq->bij", h1, h2)
    weight = jax.nn.softmax(s, axis=1)
    a = jnp.einsum("bij,bjl->bil", weight, wf)
    iawf = jax.nn.softmax(a, axis=1)
    wei = jnp.mean(iawf, axis=1, keepdims=True)      # AdaptiveAvgPool2d((1, L)) on 3-D input
    return wei * wf


if __name__ == "__main__":
    B, ngf, H, W = 2, 32, 16, 16     # image features
    outf, L = 128, 128               # attention channels / word-sequence length

    key = jax.random.PRNGKey(0)
    k1, k2, k3, k4 = jax.random.split(key, 4)
    imf = jax.random.normal(k1, (B, ngf, H, W), jnp.float32)            # NCHW, like torch
    wf = jax.random.normal(k2, (B, outf, L), jnp.float32)               # (B, outf, L)
    w1 = 0.05 * jax.random.normal(k3, (outf, ngf, 3, 3), jnp.float32)   # torch OIHW
    w2 = 0.05 * jax.random.normal(k4, (outf, ngf, 3, 3), jnp.float32)   # torch OIHW

    out = jax.jit(word_atten)(imf, wf, w1, w2)
    out = jax.block_until_ready(out)

    assert out.shape == (B, outf, L), out.shape
    assert bool(jnp.all(jnp.isfinite(out)))

    ref = word_atten_reference(imf, wf, w1, w2)
    assert bool(jnp.allclose(out, ref, rtol=2e-2, atol=1e-4))
    # Algebraic sanity: softmax(dim=1) then mean over that dim -> out == wf/outf.
    assert bool(jnp.allclose(out, wf / outf, rtol=2e-2, atol=1e-4))
    print("KERNEL_OK")
</pallas_src>

<mosaic_0001>
module attributes {stable_mosaic.version = 11 : i64} {
  func.func @kernel(%arg0: i32, %arg1: memref<1x32x256xbf16, #tpu.memory_space<vmem>>, %arg2: memref<256x288xbf16, #tpu.memory_space<vmem>>, %arg3: memref<1x128x128xf32, #tpu.memory_space<vmem>>, %arg4: memref<1x128x128xf32, #tpu.memory_space<vmem>>, %arg5: memref<32x512xbf16, #tpu.memory_space<vmem>>, %arg6: memref<288x256xbf16, #tpu.memory_space<vmem>>) attributes {dimension_semantics = [#tpu.dimension_semantics<parallel>], iteration_bounds = array<i64: 2>, scalar_prefetch = 0 : i64, scratch_operands = 2 : i64, tpu.core_type = #tpu.core_type<tc>, window_params = [{transform_indices = @transform_0, window_bounds = array<i64: 1, 32, 256>}, {pipeline_mode = #tpu.pipeline_mode<synchronous>, transform_indices = @transform_1, window_bounds = array<i64: 256, 288>}, {transform_indices = @transform_2, window_bounds = array<i64: 1, 128, 128>}, {transform_indices = @transform_3, window_bounds = array<i64: 1, 128, 128>}]} {
    %cst = arith.constant 0.000000e+00 : bf16
    %0 = vector.broadcast %cst : bf16 to vector<32x128xbf16>
    %c0 = arith.constant 0 : index
    %c0_0 = arith.constant 0 : index
    %1 = vector.load %arg5[%c0, %c0_0] : memref<32x512xbf16, #tpu.memory_space<vmem>>, vector<32x128xbf16>
    tpu.vector_store %arg5[%c0, %c0_0], %0 {strides = array<i32>} : memref<32x512xbf16, #tpu.memory_space<vmem>>, vector<32x128xbf16>,
    %c0_1 = arith.constant 0 : index
    %c384 = arith.constant 384 : index
    %2 = vector.load %arg5[%c0_1, %c384] : memref<32x512xbf16, #tpu.memory_space<vmem>>, vector<32x128xbf16>
    tpu.vector_store %arg5[%c0_1, %c384], %0 {strides = array<i32>} : memref<32x512xbf16, #tpu.memory_space<vmem>>, vector<32x128xbf16>,
    %c0_2 = arith.constant 0 : index
    %c0_3 = arith.constant 0 : index
    %c0_4 = arith.constant 0 : index
    %3 = vector.load %arg1[%c0_2, %c0_3, %c0_4] : memref<1x32x256xbf16, #tpu.memory_space<vmem>>, vector<1x32x256xbf16>
    %4 = vector.shape_cast %3 : vector<1x32x256xbf16> to vector<32x256xbf16>
    %c0_5 = arith.constant 0 : index
    %c128 = arith.constant 128 : index
    %5 = vector.load %arg5[%c0_5, %c128] : memref<32x512xbf16, #tpu.memory_space<vmem>>, vector<32x256xbf16>
    tpu.vector_store %arg5[%c0_5, %c128], %4 {strides = array<i32>} : memref<32x512xbf16, #tpu.memory_space<vmem>>, vector<32x256xbf16>,
    %6 = tpu.iota {dimensions = array<i32: 1>} : vector<1x256xi32>
    %c16_i32 = arith.constant 16 : i32
    %c0_i32 = arith.constant 0 : i32
    %7 = arith.cmpi eq, %c16_i32, %c0_i32 : i32
    %c1_i32 = arith.constant 1 : i32
    %8 = arith.select %7, %c1_i32, %c16_i32 : i32
    %9 = vector.broadcast %8 : i32 to vector<1x256xi32>
    %10 = arith.remsi %6, %9 : vector<1x256xi32>
    %c0_i32_6 = arith.constant 0 : i32
    %11 = vector.broadcast %c0_i32_6 : i32 to vector<1x256xi32>
    %12 = arith.cmpi ne, %10, %11 : vector<1x256xi32>
    %c0_i32_7 = arith.constant 0 : i32
    %13 = vector.broadcast %c0_i32_7 : i32 to vector<1x256xi32>
    %14 = arith.cmpi slt, %10, %13 : vector<1x256xi32>
    %c0_i32_8 = arith.constant 0 : i32
    %15 = arith.cmpi slt, %8, %c0_i32_8 : i32
    %16 = vector.broadcast %15 : i1 to vector<1x256xi1>
    %17 = vector.broadcast %16 : vector<1x256xi1> to vector<1x256xi1>
    %18 = arith.xori %14, %17 : vector<1x256xi1>
    %19 = arith.andi %18, %12 : vector<1x256xi1>
    %20 = vector.broadcast %8 : i32 to vector<1x256xi32>
    %21 = arith.addi %10, %20 : vector<1x256xi32>
    %22 = arith.select %19, %21, %10 : vector<1x256xi1>, vector<1x256xi32>
    %c0_i32_9 = arith.constant 0 : i32
    %23 = vector.broadcast %c0_i32_9 : i32 to vector<1x256xi32>
    %24 = arith.cmpi ne, %22, %23 : vector<1x256xi32>
    %c15_i32 = arith.constant 15 : i32
    %25 = vector.broadcast %c15_i32 : i32 to vector<1x256xi32>
    %26 = arith.cmpi ne, %22, %25 : vector<1x256xi32>
    %c0_10 = arith.constant 0 : index
    %c111 = arith.constant 111 : index
    %27 = vector.load %arg5[%c0_10, %c111] : memref<32x512xbf16, #tpu.memory_space<vmem>>, vector<32x256xbf16>
    %cst_11 = arith.constant 0.000000e+00 : bf16
    %28 = vector.broadcast %cst_11 : bf16 to vector<32x256xbf16>
    %29 = vector.shape_cast %24 : vector<1x256xi1> to vector<1x256xi1>
    %30 = vector.broadcast %29 : vector<1x256xi1> to vector<32x256xi1>
    %31 = arith.select %30, %27, %28 : vector<32x256xi1>, vector<32x256xbf16>
    %c0_12 = arith.constant 0 : index
    %c0_13 = arith.constant 0 : index
    %32 = vector.load %arg6[%c0_12, %c0_13] : memref<288x256xbf16, #tpu.memory_space<vmem>>, vector<32x256xbf16>
    tpu.vector_store %arg6[%c0_12, %c0_13], %31 {strides = array<i32>} : memref<288x256xbf16, #tpu.memory_space<vmem>>, vector<32x256xbf16>,
    %c0_14 = arith.constant 0 : index
    %c112 = arith.constant 112 : index
    %33 = vector.load %arg5[%c0_14, %c112] : memref<32x512xbf16, #tpu.memory_space<vmem>>, vector<32x256xbf16>
    %c32 = arith.constant 32 : index
    %c0_15 = arith.constant 0 : index
    %34 = vector.load %arg6[%c32, %c0_15] : memref<288x256xbf16, #tpu.memory_space<vmem>>, vector<32x256xbf16>
    tpu.vector_store %arg6[%c32, %c0_15], %33 {strides = array<i32>} : memref<288x256xbf16, #tpu.memory_space<vmem>>, vector<32x256xbf16>,
    %c0_16 = arith.constant 0 : index
    %c113 = arith.constant 113 : index
    %35 = vector.load %arg5[%c0_16, %c113] : memref<32x512xbf16, #tpu.memory_space<vmem>>, vector<32x256xbf16>
    %cst_17 = arith.constant 0.000000e+00 : bf16
    %36 = vector.broadcast %cst_17 : bf16 to vector<32x256xbf16>
    %37 = vector.shape_cast %26 : vector<1x256xi1> to vector<1x256xi1>
    %38 = vector.broadcast %37 : vector<1x256xi1> to vector<32x256xi1>
    %39 = arith.select %38, %35, %36 : vector<32x256xi1>, vector<32x256xbf16>
    %c64 = arith.constant 64 : index
    %c0_18 = arith.constant 0 : index
    %40 = vector.load %arg6[%c64, %c0_18] : memref<288x256xbf16, #tpu.memory_space<vmem>>, vector<32x256xbf16>
    tpu.vector_store %arg6[%c64, %c0_18], %39 {strides = array<i32>} : memref<288x256xbf16, #tpu.memory_space<vmem>>, vector<32x256xbf16>,
    %c0_19 = arith.constant 0 : index
    %c127 = arith.constant 127 : index
    %41 = vector.load %arg5[%c0_19, %c127] : memref<32x512xbf16, #tpu.memory_space<vmem>>, vector<32x256xbf16>
    %cst_20 = arith.constant 0.000000e+00 : bf16
    %42 = vector.broadcast %cst_20 : bf16 to vector<32x256xbf16>
    %43 = vector.shape_cast %24 : vector<1x256xi1> to vector<1x256xi1>
    %44 = vector.broadcast %43 : vector<1x256xi1> to vector<32x256xi1>
    %45 = arith.select %44, %41, %42 : vector<32x256xi1>, vector<32x256xbf16>
    %c96 = arith.constant 96 : index
    %c0_21 = arith.constant 0 : index
    %46 = vector.load %arg6[%c96, %c0_21] : memref<288x256xbf16, #tpu.memory_space<vmem>>, vector<32x256xbf16>
    tpu.vector_store %arg6[%c96, %c0_21], %45 {strides = array<i32>} : memref<288x256xbf16, #tpu.memory_space<vmem>>, vector<32x256xbf16>,
    %c0_22 = arith.constant 0 : index
    %c128_23 = arith.constant 128 : index
    %47 = vector.load %arg5[%c0_22, %c128_23] : memref<32x512xbf16, #tpu.memory_space<vmem>>, vector<32x256xbf16>
    %c128_24 = arith.constant 128 : index
    %c0_25 = arith.constant 0 : index
    %48 = vector.load %arg6[%c128_24, %c0_25] : memref<288x256xbf16, #tpu.memory_space<vmem>>, vector<32x256xbf16>
    tpu.vector_store %arg6[%c128_24, %c0_25], %47 {strides = array<i32>} : memref<288x256xbf16, #tpu.memory_space<vmem>>, vector<32x256xbf16>,
    %c0_26 = arith.constant 0 : index
    %c129 = arith.constant 129 : index
    %49 = vector.load %arg5[%c0_26, %c129] : memref<32x512xbf16, #tpu.memory_space<vmem>>, vector<32x256xbf16>
    %cst_27 = arith.constant 0.000000e+00 : bf16
    %50 = vector.broadcast %cst_27 : bf16 to vector<32x256xbf16>
    %51 = vector.shape_cast %26 : vector<1x256xi1> to vector<1x256xi1>
    %52 = vector.broadcast %51 : vector<1x256xi1> to vector<32x256xi1>
    %53 = arith.select %52, %49, %50 : vector<32x256xi1>, vector<32x256xbf16>
    %c160 = arith.constant 160 : index
    %c0_28 = arith.constant 0 : index
    %54 = vector.load %arg6[%c160, %c0_28] : memref<288x256xbf16, #tpu.memory_space<vmem>>, vector<32x256xbf16>
    tpu.vector_store %arg6[%c160, %c0_28], %53 {strides = array<i32>} : memref<288x256xbf16, #tpu.memory_space<vmem>>, vector<32x256xbf16>,
    %c0_29 = arith.constant 0 : index
    %c143 = arith.constant 143 : index
    %55 = vector.load %arg5[%c0_29, %c143] : memref<32x512xbf16, #tpu.memory_space<vmem>>, vector<32x256xbf16>
    %cst_30 = arith.constant 0.000000e+00 : bf16
    %56 = vector.broadcast %cst_30 : bf16 to vector<32x256xbf16>
    %57 = vector.shape_cast %24 : vector<1x256xi1> to vector<1x256xi1>
    %58 = vector.broadcast %57 : vector<1x256xi1> to vector<32x256xi1>
    %59 = arith.select %58, %55, %56 : vector<32x256xi1>, vector<32x256xbf16>
    %c192 = arith.constant 192 : index
    %c0_31 = arith.constant 0 : index
    %60 = vector.load %arg6[%c192, %c0_31] : memref<288x256xbf16, #tpu.memory_space<vmem>>, vector<32x256xbf16>
    tpu.vector_store %arg6[%c192, %c0_31], %59 {strides = array<i32>} : memref<288x256xbf16, #tpu.memory_space<vmem>>, vector<32x256xbf16>,
    %c0_32 = arith.constant 0 : index
    %c144 = arith.constant 144 : index
    %61 = vector.load %arg5[%c0_32, %c144] : memref<32x512xbf16, #tpu.memory_space<vmem>>, vector<32x256xbf16>
    %c224 = arith.constant 224 : index
    %c0_33 = arith.constant 0 : index
    %62 = vector.load %arg6[%c224, %c0_33] : memref<288x256xbf16, #tpu.memory_space<vmem>>, vector<32x256xbf16>
    tpu.vector_store %arg6[%c224, %c0_33], %61 {strides = array<i32>} : memref<288x256xbf16, #tpu.memory_space<vmem>>, vector<32x256xbf16>,
    %c0_34 = arith.constant 0 : index
    %c145 = arith.constant 145 : index
    %63 = vector.load %arg5[%c0_34, %c145] : memref<32x512xbf16, #tpu.memory_space<vmem>>, vector<32x256xbf16>
    %cst_35 = arith.constant 0.000000e+00 : bf16
    %64 = vector.broadcast %cst_35 : bf16 to vector<32x256xbf16>
    %65 = vector.shape_cast %26 : vector<1x256xi1> to vector<1x256xi1>
    %66 = vector.broadcast %65 : vector<1x256xi1> to vector<32x256xi1>
    %67 = arith.select %66, %63, %64 : vector<32x256xi1>, vector<32x256xbf16>
    %c256 = arith.constant 256 : index
    %c0_36 = arith.constant 0 : index
    %68 = vector.load %arg6[%c256, %c0_36] : memref<288x256xbf16, #tpu.memory_space<vmem>>, vector<32x256xbf16>
    tpu.vector_store %arg6[%c256, %c0_36], %67 {strides = array<i32>} : memref<288x256xbf16, #tpu.memory_space<vmem>>, vector<32x256xbf16>,
    %c0_37 = arith.constant 0 : index
    %c0_38 = arith.constant 0 : index
    %69 = vector.load %arg2[%c0_37, %c0_38] : memref<256x288xbf16, #tpu.memory_space<vmem>>, vector<256x288xbf16>
    %c0_39 = arith.constant 0 : index
    %c0_40 = arith.constant 0 : index
    %70 = vector.load %arg6[%c0_39, %c0_40] : memref<288x256xbf16, #tpu.memory_space<vmem>>, vector<288x256xbf16>
    %cst_41 = arith.constant dense<0.000000e+00> : vector<256x256xf32>
    %71 = tpu.matmul %69, %70, %cst_41 {dimension_numbers = #tpu.dot_dimension_numbers<[1], [0], [0], [1], [0, 0, 1, 1], [], []>} : vector<256x288xbf16>, vector<288x256xbf16>, vector<256x256xf32> -> vector<256x256xf32>
    %72 = vector.extract_strided_slice %71 {offsets = [0, 0], sizes = [128, 256], strides = [1, 1]} : vector<256x256xf32> to vector<128x256xf32>
    %73 = arith.truncf %72 : vector<128x256xf32> to vector<128x256xbf16>
    %74 = vector.extract_strided_slice %71 {offsets = [128, 0], sizes = [128, 256], strides = [1, 1]} : vector<256x256xf32> to vector<128x256xf32>
    %75 = arith.truncf %74 : vector<128x256xf32> to vector<128x256xbf16>
    %cst_42 = arith.constant dense<0.000000e+00> : vector<128x128xf32>
    %76 = tpu.matmul %73, %75, %cst_42 {dimension_numbers = #tpu.dot_dimension_numbers<[1], [1], [0], [0], [0, 0, 1, 0], [], []>} : vector<128x256xbf16>, vector<128x256xbf16>, vector<128x128xf32> -> vector<128x128xf32>
    %cst_43 = arith.constant dense<0xFF800000> : vector<128xf32>
    %77 = vector.multi_reduction <maximumf>, %76, %cst_43 [0] : vector<128x128xf32> to vector<128xf32>
    %78 = vector.shape_cast %77 : vector<128xf32> to vector<1x128xf32>
    %79 = vector.broadcast %78 : vector<1x128xf32> to vector<128x128xf32>
    %80 = arith.subf %76, %79 : vector<128x128xf32>
    %81 = math.exp %80 : vector<128x128xf32>
    %cst_44 = arith.constant dense<0.000000e+00> : vector<128xf32>
    %82 = vector.multi_reduction <add>, %81, %cst_44 [0] : vector<128x128xf32> to vector<128xf32>
    %83 = vector.shape_cast %82 : vector<128xf32> to vector<1x128xf32>
    %84 = tpu.reciprocal %83 {approx = true} : vector<1x128xf32> -> vector<1x128xf32>
    %85 = vector.broadcast %84 : vector<1x128xf32> to vector<128x128xf32>
    %86 = arith.mulf %81, %85 : vector<128x128xf32>
    %c0_45 = arith.constant 0 : index
    %c0_46 = arith.constant 0 : index
    %c0_47 = arith.constant 0 : index
    %87 = vector.load %arg3[%c0_45, %c0_46, %c0_47] : memref<1x128x128xf32, #tpu.memory_space<vmem>>, vector<1x128x128xf32>
    %88 = vector.shape_cast %87 : vector<1x128x128xf32> to vector<128x128xf32>
    %89 = arith.truncf %86 : vector<128x128xf32> to vector<128x128xbf16>
    %90 = arith.truncf %88 : vector<128x128xf32> to vector<128x128xbf16>
    %cst_48 = arith.constant dense<0.000000e+00> : vector<128x128xf32>
    %91 = tpu.matmul %89, %90, %cst_48 {dimension_numbers = #tpu.dot_dimension_numbers<[1], [0], [0], [1], [0, 0, 1, 1], [], []>} : vector<128x128xbf16>, vector<128x128xbf16>, vector<128x128xf32> -> vector<128x128xf32>
    %cst_49 = arith.constant dense<0xFF800000> : vector<128xf32>
    %92 = vector.multi_reduction <maximumf>, %91, %cst_49 [0] : vector<128x128xf32> to vector<128xf32>
    %93 = vector.shape_cast %92 : vector<128xf32> to vector<1x128xf32>
    %94 = vector.broadcast %93 : vector<1x128xf32> to vector<128x128xf32>
    %95 = arith.subf %91, %94 : vector<128x128xf32>
    %96 = math.exp %95 : vector<128x128xf32>
    %cst_50 = arith.constant dense<0.000000e+00> : vector<128xf32>
    %97 = vector.multi_reduction <add>, %96, %cst_50 [0] : vector<128x128xf32> to vector<128xf32>
    %98 = vector.shape_cast %97 : vector<128xf32> to vector<1x128xf32>
    %99 = tpu.reciprocal %98 {approx = true} : vector<1x128xf32> -> vector<1x128xf32>
    %100 = vector.broadcast %99 : vector<1x128xf32> to vector<128x128xf32>
    %101 = arith.mulf %96, %100 : vector<128x128xf32>
    %cst_51 = arith.constant dense<0.000000e+00> : vector<128xf32>
    %102 = vector.multi_reduction <add>, %101, %cst_51 [0] : vector<128x128xf32> to vector<128xf32>
    %103 = vector.shape_cast %102 : vector<128xf32> to vector<1x128xf32>
    %cst_52 = arith.constant 7.812500e-03 : f32
    %104 = vector.broadcast %cst_52 : f32 to vector<1x128xf32>
    %105 = arith.mulf %103, %104 : vector<1x128xf32>
    %106 = vector.broadcast %105 : vector<1x128xf32> to vector<128x128xf32>
    %107 = arith.mulf %106, %88 : vector<128x128xf32>
    %c0_53 = arith.constant 0 : index
    %c0_54 = arith.constant 0 : index
    %c0_55 = arith.constant 0 : index
    %108 = vector.load %arg4[%c0_53, %c0_54, %c0_55] : memref<1x128x128xf32, #tpu.memory_space<vmem>>, vector<1x128x128xf32>
    %109 = vector.shape_cast %108 : vector<1x128x128xf32> to vector<128x128xf32>
    %110 = vector.shape_cast %107 : vector<128x128xf32> to vector<1x128x128xf32>
    tpu.vector_store %arg4[%c0_53, %c0_54, %c0_55], %110 {strides = array<i32>} : memref<1x128x128xf32, #tpu.memory_space<vmem>>, vector<1x128x128xf32>,
    return
  }
  func.func @transform_0(%arg0: i32) -> (i32, i32, i32) {
    %c0_i32 = arith.constant 0 : i32
    %c0_i32_0 = arith.constant 0 : i32
    %c0_i32_1 = arith.constant 0 : i32
    return %arg0, %c0_i32, %c0_i32_0 : i32, i32, i32
  }
  func.func @transform_1(%arg0: i32) -> (i32, i32) {
    %c0_i32 = arith.constant 0 : i32
    %c0_i32_0 = arith.constant 0 : i32
    %c0_i32_1 = arith.constant 0 : i32
    return %c0_i32, %c0_i32_0 : i32, i32
  }
  func.func @transform_2(%arg0: i32) -> (i32, i32, i32) {
    %c0_i32 = arith.constant 0 : i32
    %c0_i32_0 = arith.constant 0 : i32
    %c0_i32_1 = arith.constant 0 : i32
    return %arg0, %c0_i32, %c0_i32_0 : i32, i32, i32
  }
  func.func @transform_3(%arg0: i32) -> (i32, i32, i32) {
    %c0_i32 = arith.constant 0 : i32
    %c0_i32_0 = arith.constant 0 : i32
    %c0_i32_1 = arith.constant 0 : i32
    return %arg0, %c0_i32, %c0_i32_0 : i32, i32, i32
  }
}

</mosaic_0001>

<llo_original>
// kernel: word_atten.1
$region0: #{word_atten.1}
  #allocation0 [shape = 'u32[]', space=smem, size = 0x4, offset = 0x4, fixed_abs, tag = 'smem constant byte address 0x4 - core index']
  #allocation1 [shape = 'u32[144,128]{1,0:T(1,128)}', space=vmem, size = 0x12000, scoped, tag = 'internal scratch']
  #allocation2 [shape = 'bf16[32,512]{1,0:T(8,128)(2,1)}', space=vmem, size = 0x8000, scoped, tag = 'scratch operand']
  #allocation3 [shape = 'bf16[288,256]{1,0:T(8,128)(2,1)}', space=vmem, size = 0x24000, scoped, tag = 'scratch operand']
  %s0 = inlined_call_operand.vmem [shape: bf16[2,32,256], index: 0, kind: input, shape index: {}]
  %s1 = inlined_call_operand.vmem [shape: bf16[256,288], index: 1, kind: input, shape index: {}]
  %s2 = inlined_call_operand.vmem [shape: f32[2,128,128], index: 2, kind: input, shape index: {}]
  %s3 = inlined_call_operand.hbm [shape: f32[2,128,128], index: 3, kind: output, shape index: {}]
  %s4 = sld [smem:[#allocation0]]
  $region45: #{word_atten.1} parent=0
    _
  %s6 = ssub.s32 1, %s4
  %s7 = scalar_select 0, %s6, %s4
  $region1: #{word_atten.1} parent=0
    #allocation4 [shape = 'u8[131072]{0}', space=vmem, size = 0x20000, scoped, tag = 'output window, operand 0']
    #allocation5 [shape = 's32[2]{0}', space=sflag, size = 0x8, scoped, tag = 'scoped memory for word_atten.1']
    %8 = vsyncpa [#allocation5], 0
    %s9 = scalar_lea.sflag [#allocation5], 1
    %10 = vsyncpa %s9, 0
    loop: start=0, step=1, limit=4
    $region2: #{word_atten.1} parent=1 // loop_pre_header
      _
    $region3: #{word_atten.1} parent=1 // loop_header
      %s12 = sphi 0, %s16
      %p13 = scmp.ge.s32.totalorder %s12, 4
      %s22 = sphi 0, %s24
      %s25 = sphi 0, %s22
      %s26 = sphi 0, %s25
      %s42 = sphi 0, %s26
      %s46 = sphi 0, %s46
      %s48 = sphi 0, %s46
      %s49 = sphi 0, %s48
      %s63 = sphi 0, %s49
      %s69 = sphi 0, %s71
      %s72 = sphi 0, %s69
      %s73 = sphi 0, %s72
      %s89 = sphi 0, %s73
      %s95 = sphi 0, %s97
      %s98 = sphi 0, %s95
      %s99 = sphi 0, %s98
      %s115 = sphi 0, %s99
    $region4: #{word_atten.1} parent=1 // loop_header_branch
      %15 = sbr.rel (%p13) target = $region8
    $region5: #{word_atten.1} parent=1 // loop_body
      %s17 = ssub.s32 %s12, 1
      %s18 = ssub.s32 %s12, 2
      %s19 = sadd.s32 %s12, 1
      %s20 = ssub.s32 %s12, %s19
      %p21 = scmp.eq.s32.totalorder %s20, 0
      %s23 = sadd.s32 %s22, 1
      %s24 = scalar_select %p21, %s22, %s23
      %p27 = pneg %p21
      %p28 = scmp.eq.s32.totalorder %s12, 1
      %p29 = por %p27, %p28
      %p30 = scmp.ne.s32.totalorder %s22, %s25
      %p31 = scmp.eq.s32.totalorder %s12, 0
      %p32 = por %p30, %p31
      %p33 = scmp.ne.s32.totalorder %s22, %s25
      %p34 = scmp.eq.s32.totalorder %s17, 1
      %p35 = por %p33, %p34
      %p36 = scmp.ne.s32.totalorder %s25, %s26
      %p37 = scmp.eq.s32.totalorder %s17, 0
      %p38 = por %p36, %p37
      %p39 = scmp.ne.s32.totalorder %s25, %s26
      %p40 = scmp.eq.s32.totalorder %s18, 1
      %p41 = por %p39, %p40
      %p43 = scmp.ne.s32.totalorder %s26, %s42
      %p44 = scmp.eq.s32.totalorder %s18, 0
      %p45 = por %p43, %p44
      %s47 = sadd.s32 %s46, 1
      %p50 = scmp.eq.s32.totalorder %s12, 1
      %p51 = scmp.ne.s32.totalorder %s46, %s48
      %p52 = scmp.eq.s32.totalorder %s12, 0
      %p53 = por %p51, %p52
      %p54 = scmp.ne.s32.totalorder %s46, %s48
      %p55 = scmp.eq.s32.totalorder %s17, 1
      %p56 = por %p54, %p55
      %p57 = scmp.ne.s32.totalorder %s48, %s49
      %p58 = scmp.eq.s32.totalorder %s17, 0
      %p59 = por %p57, %p58
      %p60 = scmp.ne.s32.totalorder %s48, %s49
      %p61 = scmp.eq.s32.totalorder %s18, 1
      %p62 = por %p60, %p61
      %p64 = scmp.ne.s32.totalorder %s49, %s63
      %p65 = scmp.eq.s32.totalorder %s18, 0
      %p66 = por %p64, %p65
      %s67 = ssub.s32 %s12, %s19
      %p68 = scmp.eq.s32.totalorder %s67, 0
      %s70 = sadd.s32 %s69, 1
      %s71 = scalar_select %p68, %s69, %s70
      %p74 = pneg %p68
      %p75 = scmp.eq.s32.totalorder %s12, 1
      %p76 = por %p74, %p75
      %p77 = scmp.ne.s32.totalorder %s69, %s72
      %p78 = scmp.eq.s32.totalorder %s12, 0
      %p79 = por %p77, %p78
      %p80 = scmp.ne.s32.totalorder %s69, %s72
      %p81 = scmp.eq.s32.totalorder %s17, 1
      %p82 = por %p80, %p81
      %p83 = scmp.ne.s32.totalorder %s72, %s73
      %p84 = scmp.eq.s32.totalorder %s17, 0
      %p85 = por %p83, %p84
      %p86 = scmp.ne.s32.totalorder %s72, %s73
      %p87 = scmp.eq.s32.totalorder %s18, 1
      %p88 = por %p86, %p87
      %p90 = scmp.ne.s32.totalorder %s73, %s89
      %p91 = scmp.eq.s32.totalorder %s18, 0
      %p92 = por %p90, %p91
      %s93 = ssub.s32 %s12, %s19
      %p94 = scmp.eq.s32.totalorder %s93, 0
      %s96 = sadd.s32 %s95, 1
      %s97 = scalar_select %p94, %s95, %s96
      %p100 = pneg %p94
      %p101 = scmp.eq.s32.totalorder %s12, 1
      %p102 = por %p100, %p101
      %p103 = scmp.ne.s32.totalorder %s95, %s98
      %p104 = scmp.eq.s32.totalorder %s12, 0
      %p105 = por %p103, %p104
      %p106 = scmp.ne.s32.totalorder %s95, %s98
      %p107 = scmp.eq.s32.totalorder %s17, 1
      %p108 = por %p106, %p107
      %p109 = scmp.ne.s32.totalorder %s98, %s99
      %p110 = scmp.eq.s32.totalorder %s17, 0
      %p111 = por %p109, %p110
      %p112 = scmp.ne.s32.totalorder %s98, %s99
      %p113 = scmp.eq.s32.totalorder %s18, 1
      %p114 = por %p112, %p113
      %p116 = scmp.ne.s32.totalorder %s99, %s115
      %p117 = scmp.eq.s32.totalorder %s18, 0
      %p118 = por %p116, %p117
      %p119 = scmp.le.s32.totalorder 1, %s12
      %p120 = scmp.lt.s32.totalorder %s12, 3
      %p121 = pnand %p119, %p120
      %p122 = pneg %p121
      // Predicated region
      $region9: #{word_atten.1} parent=5 // pred_check
        _
      $region10: #{word_atten.1} parent=5 // pred_check_branch
        %124 = sbr.rel (%p121) target = $region12
      $region11: #{word_atten.1} parent=5 // pred_region
        %s125 = ssub.s32 %s12, 1
        // Predicated region
        $region13: #{word_atten.1} parent=11 // pred_check
          %p126 = pneg %p59
        $region14: #{word_atten.1} parent=11 // pred_check_branch
          %128 = sbr.rel (%p126) target = $region16
        $region15: #{word_atten.1} parent=11 // pred_region
          _
        $region16: #{word_atten.1} parent=11 // pred_fallthru
          _
      $region12: #{word_atten.1} parent=5 // pred_fallthru
        _
      %p129 = scmp.lt.s32.totalorder %s12, 2
      // Predicated region
      $region17: #{word_atten.1} parent=5 // pred_check
        %p130 = pneg %p129
      $region18: #{word_atten.1} parent=5 // pred_check_branch
        %132 = sbr.rel (%p130) target = $region20
      $region19: #{word_atten.1} parent=5 // pred_region
        // Predicated region
        $region21: #{word_atten.1} parent=19 // pred_check
          %p133 = pneg %p32
        $region22: #{word_atten.1} parent=19 // pred_check_branch
          %135 = sbr.rel (%p133) target = $region24
        $region23: #{word_atten.1} parent=19 // pred_region
          %p136 = scmp.lt.s32.totalorder %s12, 1
          %s137 = scalar_select %p136, %s12, 1
          %s138 = smul.addr %s137, 8
          %s139 = smul.addr %s138, 4
          %s140 = scalar_lea.vmem %s0, %s139
        $region24: #{word_atten.1} parent=19 // pred_fallthru
          _
        // Predicated region
        $region25: #{word_atten.1} parent=19 // pred_check
          %p141 = pneg %p79
        $region26: #{word_atten.1} parent=19 // pred_check_branch
          %143 = sbr.rel (%p141) target = $region28
        $region27: #{word_atten.1} parent=19 // pred_region
          %p144 = scmp.lt.s32.totalorder %s12, 1
          %s145 = scalar_select %p144, %s12, 1
          %s146 = smul.addr %s145, 16
          %s147 = smul.addr %s146, 8
          %s148 = scalar_lea.vmem %s2, %s147
        $region28: #{word_atten.1} parent=19 // pred_fallthru
          _
      $region20: #{word_atten.1} parent=5 // pred_fallthru
        _
      %p149 = scmp.le.s32.totalorder 1, %s12
      %p150 = scmp.lt.s32.totalorder %s12, 3
      %p151 = pnand %p149, %p150
      %p152 = pneg %p151
      // Predicated region
      $region29: #{word_atten.1} parent=5 // pred_check
        _
      $region30: #{word_atten.1} parent=5 // pred_check_branch
        %154 = sbr.rel (%p151) target = $region32
      $region31: #{word_atten.1} parent=5 // pred_region
        %s155 = ssub.s32 %s12, 1
        %p156 = scmp.lt.s32.totalorder %s17, 1
        %s157 = scalar_select %p156, %s17, 1
        %s158 = smul.addr %s157, 8
        %s159 = smul.addr %s158, 4
        %s160 = scalar_lea.vmem %s0, %s159
        %p161 = pneg %p38
        %p162 = pneg %p35
        %p163 = pneg %p59
        %p164 = pneg %p56
        %p165 = scmp.lt.s32.totalorder %s17, 1
        %s166 = scalar_select %p165, %s17, 1
        %s167 = smul.addr %s166, 16
        %s168 = smul.addr %s167, 8
        %s169 = scalar_lea.vmem %s2, %s168
        %p170 = pneg %p85
        %p171 = pneg %p82
        %p172 = pneg %p111
        %p173 = pneg %p108
        %s174 = sand.u32 %s98, 1
        %s175 = scalar_lea.sflag [#allocation5], %s174
        %s176 = sand.u32 %s98, 1
        %s177 = smul.addr %s176, 128
        %s178 = scalar_lea.vmem [#allocation4], %s177
        %p179 = scmp.lt.s32.totalorder %s17, 1
        %s180 = scalar_select %p179, %s17, 1
        %s181 = smul.addr %s180, 8
        %s182 = smul.addr %s181, 4
        %s183 = scalar_lea.vmem %s0, %s182
        %p184 = scmp.lt.s32.totalorder %s17, 1
        %s185 = scalar_select %p184, %s17, 1
        %s186 = smul.addr %s185, 16
        %s187 = smul.addr %s186, 8
        %s188 = scalar_lea.vmem %s2, %s187
        %192 = vst [vmem:[#allocation2] sm:$0xf] 0
        %193 = vst [vmem:[#allocation2 + $0x10] sm:$0xf] 0
        %194 = vst [vmem:[#allocation2 + $0x20] sm:$0xf] 0
        %195 = vst [vmem:[#allocation2 + $0x30] sm:$0xf] 0
        %196 = vst [vmem:[#allocation2 + $0xc] sm:$0xf] 0
        %197 = vst [vmem:[#allocation2 + $0x1c] sm:$0xf] 0
        %198 = vst [vmem:[#allocation2 + $0x2c] sm:$0xf] 0
        %199 = vst [vmem:[#allocation2 + $0x3c] sm:$0xf] 0
        %v200 = vld [vmem:[%s183] sm:$0xff]
        %v201 = vld [vmem:[%s183 + $0x8] sm:$0xff]
        %v202 = vld [vmem:[%s183 + $0x10] sm:$0xff]
        %v203 = vld [vmem:[%s183 + $0x18] sm:$0xff]
        %204 = vst [vmem:[#allocation2 + $0x4] sm:$0xff] %v200
        %205 = vst [vmem:[#allocation2 + $0x14] sm:$0xff] %v201
        %206 = vst [vmem:[#allocation2 + $0x24] sm:$0xff] %v202
        %207 = vst [vmem:[#allocation2 + $0x34] sm:$0xff] %v203
        %v208 = vlaneseq
        %v209 = vand.u32 %v208, 127
        %v210 = vadd.s32 %v209, 128
        %vm211 = vcmp.lt.s32.totalorder %v209, 0
        %v212 = vsub.s32 0, %v209
        %v213 = vsel %vm211, %v212, %v209
        %v214 = vshrl.u32 %v213, 4
        %v215 = vand.u32 %v213, 15
        %v216 = vsub.s32 0, %v215
        %v217 = vsel %vm211, %v216, %v215
        %vm218 = vcmp.lt.s32.totalorder %v210, 0
        %v219 = vsub.s32 0, %v210
        %v220 = vsel %vm218, %v219, %v210
        %v221 = vshrl.u32 %v220, 4
        %v222 = vand.u32 %v220, 15
        %v223 = vsub.s32 0, %v222
        %v224 = vsel %vm218, %v223, %v222
        %vm225 = vcmp.ne.s32.totalorder %v217, 0
        %vm226 = vcmp.ne.s32.totalorder %v224, 0
        %vm227 = vcmp.lt.s32.totalorder %v217, 0
        %vm228 = vcmp.lt.s32.totalorder %v224, 0
        %vm229 = vmand %vm227, %vm225
        %vm230 = vmand %vm228, %vm226
        %v231 = vadd.s32 %v217, 16
        %v232 = vadd.s32 %v224, 16
        %v233 = vsel %vm229, %v231, %v217
        %v234 = vsel %vm230, %v232, %v224
        %vm235 = vcmp.ne.s32.totalorder %v233, 0
        %vm236 = vcmp.ne.s32.totalorder %v234, 0
        %vm237 = vcmp.ne.s32.totalorder %v233, 15
        %vm238 = vcmp.ne.s32.totalorder %v234, 15
        %v239 = vld [vmem:[#allocation2] sm:$0xff]
        %v240 = vld [vmem:[#allocation2 + $0x8] sm:$0xf]
        %v241 = vld [vmem:[#allocation2 + $0x10] sm:$0xff]
        %v242 = vld [vmem:[#allocation2 + $0x18] sm:$0xf]
        %v243 = vld [vmem:[#allocation2 + $0x20] sm:$0xff]
        %v244 = vld [vmem:[#allocation2 + $0x28] sm:$0xf]
        %v245 = vld [vmem:[#allocation2 + $0x30] sm:$0xff]
        %v246 = vld [vmem:[#allocation2 + $0x38] sm:$0xf]
        %v247 = vsel %vm235, 1, 0
        %v248 = vsel %vm236, 1, 0
        %vm249 = vcmp.eq.s32.totalorder %v247, 1
        %vm250 = vcmp.eq.s32.totalorder %v248, 1
        %vm251 = vmpackc.low %vm250, %vm249
        %v252 = vsel %vm251, 65537, 0
        %253 = vrot.lane.b32.xlu0 %v252, 111
        %v254 = vpop.permute.xlu0 %253
        %v255 = vrot.slane %v254, 4
        %vm256 = vcmask 908288
        %v257 = vsel %vm256, %v255, %v254
        %vm258 = vcmp.ne.s16.totalorder %v257, 0
        %vm259 = vcmp.ne.s16.totalorder %v255, 0
        %v260 = vsel %vm258, %v239, 0
        %v261 = vsel %vm259, %v240, 0
        %v262 = vsel %vm258, %v241, 0
        %v263 = vsel %vm259, %v242, 0
        %v264 = vsel %vm258, %v243, 0
        %v265 = vsel %vm259, %v244, 0
        %v266 = vsel %vm258, %v245, 0
        %v267 = vsel %vm259, %v246, 0
        %276 = vrot.lane.b32.xlu0 %v260, 17
        %v277 = vpop.permute.xlu0 %276
        %278 = vrot.lane.b32.xlu0 %v261, 17
        %v279 = vpop.permute.xlu0 %278
        %280 = vrot.lane.b32.xlu0 %v262, 17
        %v281 = vpop.permute.xlu0 %280
        %282 = vrot.lane.b32.xlu0 %v263, 17
        %v283 = vpop.permute.xlu0 %282
        %284 = vrot.lane.b32.xlu0 %v264, 17
        %v285 = vpop.permute.xlu0 %284
        %286 = vrot.lane.b32.xlu0 %v265, 17
        %v287 = vpop.permute.xlu0 %286
        %288 = vrot.lane.b32.xlu0 %v266, 17
        %v289 = vpop.permute.xlu0 %288
        %290 = vrot.lane.b32.xlu0 %v267, 17
        %v291 = vpop.permute.xlu0 %290
        %v292 = vrot.slane %v277, 4
        %v293 = vrot.slane %v279, 4
        %v294 = vrot.slane %v281, 4
        %v295 = vrot.slane %v283, 4
        %v296 = vrot.slane %v285, 4
        %v297 = vrot.slane %v287, 4
        %v298 = vrot.slane %v289, 4
        %v299 = vrot.slane %v291, 4
        %vm300 = vcmask 1043456
        %v301 = vsel %vm300, %v292, %v293
        %vm302 = vcmask 138240
        %v303 = vsel %vm302, %v277, %v301
        %v304 = vsel %vm300, %v294, %v295
        %v305 = vsel %vm302, %v281, %v304
        %v306 = vsel %vm300, %v296, %v297
        %v307 = vsel %vm302, %v285, %v306
        %v308 = vsel %vm300, %v298, %v299
        %v309 = vsel %vm302, %v289, %v308
        %314 = vst [vmem:[#allocation3] sm:$0xff] %v303
        %315 = vst [vmem:[#allocation3 + $0x8] sm:$0xff] %v305
        %316 = vst [vmem:[#allocation3 + $0x10] sm:$0xff] %v307
        %317 = vst [vmem:[#allocation3 + $0x18] sm:$0xff] %v309
        %v318 = vld [vmem:[#allocation2] sm:$0xff]
        %v319 = vld [vmem:[#allocation2 + $0x8] sm:$0xf]
        %v320 = vld [vmem:[#allocation2 + $0x10] sm:$0xff]
        %v321 = vld [vmem:[#allocation2 + $0x18] sm:$0xf]
        %v322 = vld [vmem:[#allocation2 + $0x20] sm:$0xff]
        %v323 = vld [vmem:[#allocation2 + $0x28] sm:$0xf]
        %v324 = vld [vmem:[#allocation2 + $0x30] sm:$0xff]
        %v325 = vld [vmem:[#allocation2 + $0x38] sm:$0xf]
        %334 = vrot.lane.b32.xlu0 %v318, 16
        %v335 = vpop.permute.xlu0 %334
        %336 = vrot.lane.b32.xlu0 %v319, 16
        %v337 = vpop.permute.xlu0 %336
        %338 = vrot.lane.b32.xlu0 %v320, 16
        %v339 = vpop.permute.xlu0 %338
        %340 = vrot.lane.b32.xlu0 %v321, 16
        %v341 = vpop.permute.xlu0 %340
        %342 = vrot.lane.b32.xlu0 %v322, 16
        %v343 = vpop.permute.xlu0 %342
        %344 = vrot.lane.b32.xlu0 %v323, 16
        %v345 = vpop.permute.xlu0 %344
        %346 = vrot.lane.b32.xlu0 %v324, 16
        %v347 = vpop.permute.xlu0 %346
        %348 = vrot.lane.b32.xlu0 %v325, 16
        %v349 = vpop.permute.xlu0 %348
        %v350 = vrot.slane %v335, 4
        %v351 = vrot.slane %v337, 4
        %v352 = vrot.slane %v339, 4
        %v353 = vrot.slane %v341, 4
        %v354 = vrot.slane %v343, 4
        %v355 = vrot.slane %v345, 4
        %v356 = vrot.slane %v347, 4
        %v357 = vrot.slane %v349, 4
        %v358 = vsel %vm300, %v350, %v351
        %vm359 = vcmask 130048
        %v360 = vsel %vm359, %v335, %v358
        %v361 = vsel %vm300, %v352, %v353
        %v362 = vsel %vm359, %v339, %v361
        %v363 = vsel %vm300, %v354, %v355
        %v364 = vsel %vm359, %v343, %v363
        %v365 = vsel %vm300, %v356, %v357
        %v366 = vsel %vm359, %v347, %v365
        %371 = vst [vmem:[#allocation3 + $0x20] sm:$0xff] %v360
        %372 = vst [vmem:[#allocation3 + $0x28] sm:$0xff] %v362
        %373 = vst [vmem:[#allocation3 + $0x30] sm:$0xff] %v364
        %374 = vst [vmem:[#allocation3 + $0x38] sm:$0xff] %v366
        %v375 = vld [vmem:[#allocation2] sm:$0xff]
        %v376 = vld [vmem:[#allocation2 + $0x8] sm:$0xf]
        %v377 = vld [vmem:[#allocation2 + $0x10] sm:$0xff]
        %v378 = vld [vmem:[#allocation2 + $0x18] sm:$0xf]
        %v379 = vld [vmem:[#allocation2 + $0x20] sm:$0xff]
        %v380 = vld [vmem:[#allocation2 + $0x28] sm:$0xf]
        %v381 = vld [vmem:[#allocation2 + $0x30] sm:$0xff]
        %v382 = vld [vmem:[#allocation2 + $0x38] sm:$0xf]
        %v383 = vsel %vm237, 1, 0
        %v384 = vsel %vm238, 1, 0
        %vm385 = vcmp.eq.s32.totalorder %v383, 1
        %vm386 = vcmp.eq.s32.totalorder %v384, 1
        %vm387 = vmpackc.low %vm386, %vm385
        %v388 = vsel %vm387, 65537, 0
        %389 = vrot.lane.b32.xlu0 %v388, 113
        %v390 = vpop.permute.xlu0 %389
        %v391 = vrot.slane %v390, 4
        %vm392 = vcmask 924672
        %v393 = vsel %vm392, %v391, %v390
        %vm394 = vcmp.ne.s16.totalorder %v393, 0
        %vm395 = vcmp.ne.s16.totalorder %v391, 0
        %v396 = vsel %vm394, %v375, 0
        %v397 = vsel %vm395, %v376, 0
        %v398 = vsel %vm394, %v377, 0
        %v399 = vsel %vm395, %v378, 0
        %v400 = vsel %vm394, %v379, 0
        %v401 = vsel %vm395, %v380, 0
        %v402 = vsel %vm394, %v381, 0
        %v403 = vsel %vm395, %v382, 0
        %412 = vrot.lane.b32.xlu0 %v396, 15
        %v413 = vpop.permute.xlu0 %412
        %414 = vrot.lane.b32.xlu0 %v397, 15
        %v415 = vpop.permute.xlu0 %414
        %416 = vrot.lane.b32.xlu0 %v398, 15
        %v417 = vpop.permute.xlu0 %416
        %418 = vrot.lane.b32.xlu0 %v399, 15
        %v419 = vpop.permute.xlu0 %418
        %420 = vrot.lane.b32.xlu0 %v400, 15
        %v421 = vpop.permute.xlu0 %420
        %422 = vrot.lane.b32.xlu0 %v401, 15
        %v423 = vpop.permute.xlu0 %422
        %424 = vrot.lane.b32.xlu0 %v402, 15
        %v425 = vpop.permute.xlu0 %424
        %426 = vrot.lane.b32.xlu0 %v403, 15
        %v427 = vpop.permute.xlu0 %426
        %v428 = vrot.slane %v413, 4
        %v429 = vrot.slane %v415, 4
        %v430 = vrot.slane %v417, 4
        %v431 = vrot.slane %v419, 4
        %v432 = vrot.slane %v421, 4
        %v433 = vrot.slane %v423, 4
        %v434 = vrot.slane %v425, 4
        %v435 = vrot.slane %v427, 4
        %v436 = vsel %vm300, %v428, %v429
        %vm437 = vcmask 121856
        %v438 = vsel %vm437, %v413, %v436
        %v439 = vsel %vm300, %v430, %v431
        %v440 = vsel %vm437, %v417, %v439
        %v441 = vsel %vm300, %v432, %v433
        %v442 = vsel %vm437, %v421, %v441
        %v443 = vsel %vm300, %v434, %v435
        %v444 = vsel %vm437, %v425, %v443
        %449 = vst [vmem:[#allocation3 + $0x40] sm:$0xff] %v438
        %450 = vst [vmem:[#allocation3 + $0x48] sm:$0xff] %v440
        %451 = vst [vmem:[#allocation3 + $0x50] sm:$0xff] %v442
        %452 = vst [vmem:[#allocation3 + $0x58] sm:$0xff] %v444
        %v453 = vld [vmem:[#allocation2] sm:$0xff]
        %v454 = vld [vmem:[#allocation2 + $0x8] sm:$0xf]
        %v455 = vld [vmem:[#allocation2 + $0x10] sm:$0xff]
        %v456 = vld [vmem:[#allocation2 + $0x18] sm:$0xf]
        %v457 = vld [vmem:[#allocation2 + $0x20] sm:$0xff]
        %v458 = vld [vmem:[#allocation2 + $0x28] sm:$0xf]
        %v459 = vld [vmem:[#allocation2 + $0x30] sm:$0xff]
        %v460 = vld [vmem:[#allocation2 + $0x38] sm:$0xf]
        %461 = vrot.lane.b32.xlu0 %v252, 127
        %v462 = vpop.permute.xlu0 %461
        %v463 = vrot.slane %v462, 4
        %vm464 = vcmask 1039360
        %v465 = vsel %vm464, %v463, %v462
        %vm466 = vcmp.ne.s16.totalorder %v465, 0
        %vm467 = vcmp.ne.s16.totalorder %v463, 0
        %v468 = vsel %vm466, %v453, 0
        %v469 = vsel %vm467, %v454, 0
        %v470 = vsel %vm466, %v455, 0
        %v471 = vsel %vm467, %v456, 0
        %v472 = vsel %vm466, %v457, 0
        %v473 = vsel %vm467, %v458, 0
        %v474 = vsel %vm466, %v459, 0
        %v475 = vsel %vm467, %v460, 0
        %484 = vrot.lane.b32.xlu0 %v468, 1
        %v485 = vpop.permute.xlu0 %484
        %486 = vrot.lane.b32.xlu0 %v469, 1
        %v487 = vpop.permute.xlu0 %486
        %488 = vrot.lane.b32.xlu0 %v470, 1
        %v489 = vpop.permute.xlu0 %488
        %490 = vrot.lane.b32.xlu0 %v471, 1
        %v491 = vpop.permute.xlu0 %490
        %492 = vrot.lane.b32.xlu0 %v472, 1
        %v493 = vpop.permute.xlu0 %492
        %494 = vrot.lane.b32.xlu0 %v473, 1
        %v495 = vpop.permute.xlu0 %494
        %496 = vrot.lane.b32.xlu0 %v474, 1
        %v497 = vpop.permute.xlu0 %496
        %498 = vrot.lane.b32.xlu0 %v475, 1
        %v499 = vpop.permute.xlu0 %498
        %v500 = vrot.slane %v485, 4
        %v501 = vrot.slane %v487, 4
        %v502 = vrot.slane %v489, 4
        %v503 = vrot.slane %v491, 4
        %v504 = vrot.slane %v493, 4
        %v505 = vrot.slane %v495, 4
        %v506 = vrot.slane %v497, 4
        %v507 = vrot.slane %v499, 4
        %v508 = vsel %vm300, %v500, %v501
        %vm509 = vcmask 7168
        %v510 = vsel %vm509, %v485, %v508
        %v511 = vsel %vm300, %v502, %v503
        %v512 = vsel %vm509, %v489, %v511
        %v513 = vsel %vm300, %v504, %v505
        %v514 = vsel %vm509, %v493, %v513
        %v515 = vsel %vm300, %v506, %v507
        %v516 = vsel %vm509, %v497, %v515
        %521 = vst [vmem:[#allocation3 + $0x60] sm:$0xff] %v510
        %522 = vst [vmem:[#allocation3 + $0x68] sm:$0xff] %v512
        %523 = vst [vmem:[#allocation3 + $0x70] sm:$0xff] %v514
        %524 = vst [vmem:[#allocation3 + $0x78] sm:$0xff] %v516
        %v525 = vld [vmem:[#allocation2 + $0x4] sm:$0xff]
        %v526 = vld [vmem:[#allocation2 + $0x14] sm:$0xff]
        %v527 = vld [vmem:[#allocation2 + $0x24] sm:$0xff]
        %v528 = vld [vmem:[#allocation2 + $0x34] sm:$0xff]
        %529 = vst [vmem:[#allocation3 + $0x80] sm:$0xff] %v525
        %530 = vst [vmem:[#allocation3 + $0x88] sm:$0xff] %v526
        %531 = vst [vmem:[#allocation3 + $0x90] sm:$0xff] %v527
        %532 = vst [vmem:[#allocation3 + $0x98] sm:$0xff] %v528
        %v533 = vld [vmem:[#allocation2 + $0x4] sm:$0xff]
        %v534 = vld [vmem:[#allocation2 + $0xc] sm:$0xf]
        %v535 = vld [vmem:[#allocation2 + $0x14] sm:$0xff]
        %v536 = vld [vmem:[#allocation2 + $0x1c] sm:$0xf]
        %v537 = vld [vmem:[#allocation2 + $0x24] sm:$0xff]
        %v538 = vld [vmem:[#allocation2 + $0x2c] sm:$0xf]
        %v539 = vld [vmem:[#allocation2 + $0x34] sm:$0xff]
        %v540 = vld [vmem:[#allocation2 + $0x3c] sm:$0xf]
        %541 = vrot.lane.b32.xlu0 %v388, 1
        %v542 = vpop.permute.xlu0 %541
        %v543 = vrot.slane %v542, 4
        %v544 = vsel %vm509, %v543, %v542
        %vm545 = vcmp.ne.s16.totalorder %v544, 0
        %vm546 = vcmp.ne.s16.totalorder %v543, 0
        %v547 = vsel %vm545, %v533, 0
        %v548 = vsel %vm546, %v534, 0
        %v549 = vsel %vm545, %v535, 0
        %v550 = vsel %vm546, %v536, 0
        %v551 = vsel %vm545, %v537, 0
        %v552 = vsel %vm546, %v538, 0
        %v553 = vsel %vm545, %v539, 0
        %v554 = vsel %vm546, %v540, 0
        %563 = vrot.lane.b32.xlu0 %v547, 127
        %v564 = vpop.permute.xlu0 %563
        %565 = vrot.lane.b32.xlu0 %v548, 127
        %v566 = vpop.permute.xlu0 %565
        %567 = vrot.lane.b32.xlu0 %v549, 127
        %v568 = vpop.permute.xlu0 %567
        %569 = vrot.lane.b32.xlu0 %v550, 127
        %v570 = vpop.permute.xlu0 %569
        %571 = vrot.lane.b32.xlu0 %v551, 127
        %v572 = vpop.permute.xlu0 %571
        %573 = vrot.lane.b32.xlu0 %v552, 127
        %v574 = vpop.permute.xlu0 %573
        %575 = vrot.lane.b32.xlu0 %v553, 127
        %v576 = vpop.permute.xlu0 %575
        %577 = vrot.lane.b32.xlu0 %v554, 127
        %v578 = vpop.permute.xlu0 %577
        %v579 = vrot.slane %v564, 4
        %v580 = vrot.slane %v566, 4
        %v581 = vrot.slane %v568, 4
        %v582 = vrot.slane %v570, 4
        %v583 = vrot.slane %v572, 4
        %v584 = vrot.slane %v574, 4
        %v585 = vrot.slane %v576, 4
        %v586 = vrot.slane %v578, 4
        %v587 = vsel %vm300, %v579, %v580
        %v588 = vsel %vm464, %v564, %v587
        %v589 = vsel %vm300, %v581, %v582
        %v590 = vsel %vm464, %v568, %v589
        %v591 = vsel %vm300, %v583, %v584
        %v592 = vsel %vm464, %v572, %v591
        %v593 = vsel %vm300, %v585, %v586
        %v594 = vsel %vm464, %v576, %v593
        %599 = vst [vmem:[#allocation3 + $0xa0] sm:$0xff] %v588
        %600 = vst [vmem:[#allocation3 + $0xa8] sm:$0xff] %v590
        %601 = vst [vmem:[#allocation3 + $0xb0] sm:$0xff] %v592
        %602 = vst [vmem:[#allocation3 + $0xb8] sm:$0xff] %v594
        %v603 = vld [vmem:[#allocation2 + $0x4] sm:$0xff]
        %v604 = vld [vmem:[#allocation2 + $0xc] sm:$0xf]
        %v605 = vld [vmem:[#allocation2 + $0x14] sm:$0xff]
        %v606 = vld [vmem:[#allocation2 + $0x1c] sm:$0xf]
        %v607 = vld [vmem:[#allocation2 + $0x24] sm:$0xff]
        %v608 = vld [vmem:[#allocation2 + $0x2c] sm:$0xf]
        %v609 = vld [vmem:[#allocation2 + $0x34] sm:$0xff]
        %v610 = vld [vmem:[#allocation2 + $0x3c] sm:$0xf]
        %611 = vrot.lane.b32.xlu0 %v252, 15
        %v612 = vpop.permute.xlu0 %611
        %v613 = vrot.slane %v612, 4
        %v614 = vsel %vm437, %v613, %v612
        %vm615 = vcmp.ne.s16.totalorder %v614, 0
        %vm616 = vcmp.ne.s16.totalorder %v613, 0
        %v617 = vsel %vm615, %v603, 0
        %v618 = vsel %vm616, %v604, 0
        %v619 = vsel %vm615, %v605, 0
        %v620 = vsel %vm616, %v606, 0
        %v621 = vsel %vm615, %v607, 0
        %v622 = vsel %vm616, %v608, 0
        %v623 = vsel %vm615, %v609, 0
        %v624 = vsel %vm616, %v610, 0
        %633 = vrot.lane.b32.xlu0 %v617, 113
        %v634 = vpop.permute.xlu0 %633
        %635 = vrot.lane.b32.xlu0 %v618, 113
        %v636 = vpop.permute.xlu0 %635
        %637 = vrot.lane.b32.xlu0 %v619, 113
        %v638 = vpop.permute.xlu0 %637
        %639 = vrot.lane.b32.xlu0 %v620, 113
        %v640 = vpop.permute.xlu0 %639
        %641 = vrot.lane.b32.xlu0 %v621, 113
        %v642 = vpop.permute.xlu0 %641
        %643 = vrot.lane.b32.xlu0 %v622, 113
        %v644 = vpop.permute.xlu0 %643
        %645 = vrot.lane.b32.xlu0 %v623, 113
        %v646 = vpop.permute.xlu0 %645
        %647 = vrot.lane.b32.xlu0 %v624, 113
        %v648 = vpop.permute.xlu0 %647
        %v649 = vrot.slane %v634, 4
        %v650 = vrot.slane %v636, 4
        %v651 = vrot.slane %v638, 4
        %v652 = vrot.slane %v640, 4
        %v653 = vrot.slane %v642, 4
        %v654 = vrot.slane %v644, 4
        %v655 = vrot.slane %v646, 4
        %v656 = vrot.slane %v648, 4
        %v657 = vsel %vm300, %v649, %v650
        %v658 = vsel %vm392, %v634, %v657
        %v659 = vsel %vm300, %v651, %v652
        %v660 = vsel %vm392, %v638, %v659
        %v661 = vsel %vm300, %v653, %v654
        %v662 = vsel %vm392, %v642, %v661
        %v663 = vsel %vm300, %v655, %v656
        %v664 = vsel %vm392, %v646, %v663
        %669 = vst [vmem:[#allocation3 + $0xc0] sm:$0xff] %v658
        %670 = vst [vmem:[#allocation3 + $0xc8] sm:$0xff] %v660
        %671 = vst [vmem:[#allocation3 + $0xd0] sm:$0xff] %v662
        %672 = vst [vmem:[#allocation3 + $0xd8] sm:$0xff] %v664
        %v673 = vld [vmem:[#allocation2 + $0x4] sm:$0xff]
        %v674 = vld [vmem:[#allocation2 + $0xc] sm:$0xf]
        %v675 = vld [vmem:[#allocation2 + $0x14] sm:$0xff]
        %v676 = vld [vmem:[#allocation2 + $0x1c] sm:$0xf]
        %v677 = vld [vmem:[#allocation2 + $0x24] sm:$0xff]
        %v678 = vld [vmem:[#allocation2 + $0x2c] sm:$0xf]
        %v679 = vld [vmem:[#allocation2 + $0x34] sm:$0xff]
        %v680 = vld [vmem:[#allocation2 + $0x3c] sm:$0xf]
        %689 = vrot.lane.b32.xlu0 %v673, 112
        %v690 = vpop.permute.xlu0 %689
        %691 = vrot.lane.b32.xlu0 %v674, 112
        %v692 = vpop.permute.xlu0 %691
        %693 = vrot.lane.b32.xlu0 %v675, 112
        %v694 = vpop.permute.xlu0 %693
        %695 = vrot.lane.b32.xlu0 %v676, 112
        %v696 = vpop.permute.xlu0 %695
        %697 = vrot.lane.b32.xlu0 %v677, 112
        %v698 = vpop.permute.xlu0 %697
        %699 = vrot.lane.b32.xlu0 %v678, 112
        %v700 = vpop.permute.xlu0 %699
        %701 = vrot.lane.b32.xlu0 %v679, 112
        %v702 = vpop.permute.xlu0 %701
        %703 = vrot.lane.b32.xlu0 %v680, 112
        %v704 = vpop.permute.xlu0 %703
        %v705 = vrot.slane %v690, 4
        %v706 = vrot.slane %v692, 4
        %v707 = vrot.slane %v694, 4
        %v708 = vrot.slane %v696, 4
        %v709 = vrot.slane %v698, 4
        %v710 = vrot.slane %v700, 4
        %v711 = vrot.slane %v702, 4
        %v712 = vrot.slane %v704, 4
        %v713 = vsel %vm300, %v705, %v706
        %vm714 = vcmask 916480
        %v715 = vsel %vm714, %v690, %v713
        %v716 = vsel %vm300, %v707, %v708
        %v717 = vsel %vm714, %v694, %v716
        %v718 = vsel %vm300, %v709, %v710
        %v719 = vsel %vm714, %v698, %v718
        %v720 = vsel %vm300, %v711, %v712
        %v721 = vsel %vm714, %v702, %v720
        %726 = vst [vmem:[#allocation3 + $0xe0] sm:$0xff] %v715
        %727 = vst [vmem:[#allocation3 + $0xe8] sm:$0xff] %v717
        %728 = vst [vmem:[#allocation3 + $0xf0] sm:$0xff] %v719
        %729 = vst [vmem:[#allocation3 + $0xf8] sm:$0xff] %v721
        %v730 = vld [vmem:[#allocation2 + $0x4] sm:$0xff]
        %v731 = vld [vmem:[#allocation2 + $0xc] sm:$0xf]
        %v732 = vld [vmem:[#allocation2 + $0x14] sm:$0xff]
        %v733 = vld [vmem:[#allocation2 + $0x1c] sm:$0xf]
        %v734 = vld [vmem:[#allocation2 + $0x24] sm:$0xff]
        %v735 = vld [vmem:[#allocation2 + $0x2c] sm:$0xf]
        %v736 = vld [vmem:[#allocation2 + $0x34] sm:$0xff]
        %v737 = vld [vmem:[#allocation2 + $0x3c] sm:$0xf]
        %738 = vrot.lane.b32.xlu0 %v388, 17
        %v739 = vpop.permute.xlu0 %738
        %v740 = vrot.slane %v739, 4
        %v741 = vsel %vm302, %v740, %v739
        %vm742 = vcmp.ne.s16.totalorder %v741, 0
        %vm743 = vcmp.ne.s16.totalorder %v740, 0
        %v744 = vsel %vm742, %v730, 0
        %v745 = vsel %vm743, %v731, 0
        %v746 = vsel %vm742, %v732, 0
        %v747 = vsel %vm743, %v733, 0
        %v748 = vsel %vm742, %v734, 0
        %v749 = vsel %vm743, %v735, 0
        %v750 = vsel %vm742, %v736, 0
        %v751 = vsel %vm743, %v737, 0
        %760 = vrot.lane.b32.xlu0 %v744, 111
        %v761 = vpop.permute.xlu0 %760
        %762 = vrot.lane.b32.xlu0 %v745, 111
        %v763 = vpop.permute.xlu0 %762
        %764 = vrot.lane.b32.xlu0 %v746, 111
        %v765 = vpop.permute.xlu0 %764
        %766 = vrot.lane.b32.xlu0 %v747, 111
        %v767 = vpop.permute.xlu0 %766
        %768 = vrot.lane.b32.xlu0 %v748, 111
        %v769 = vpop.permute.xlu0 %768
        %770 = vrot.lane.b32.xlu0 %v749, 111
        %v771 = vpop.permute.xlu0 %770
        %772 = vrot.lane.b32.xlu0 %v750, 111
        %v773 = vpop.permute.xlu0 %772
        %774 = vrot.lane.b32.xlu0 %v751, 111
        %v775 = vpop.permute.xlu0 %774
        %v776 = vrot.slane %v761, 4
        %v777 = vrot.slane %v763, 4
        %v778 = vrot.slane %v765, 4
        %v779 = vrot.slane %v767, 4
        %v780 = vrot.slane %v769, 4
        %v781 = vrot.slane %v771, 4
        %v782 = vrot.slane %v773, 4
        %v783 = vrot.slane %v775, 4
        %v784 = vsel %vm300, %v776, %v777
        %v785 = vsel %vm256, %v761, %v784
        %v786 = vsel %vm300, %v778, %v779
        %v787 = vsel %vm256, %v765, %v786
        %v788 = vsel %vm300, %v780, %v781
        %v789 = vsel %vm256, %v769, %v788
        %v790 = vsel %vm300, %v782, %v783
        %v791 = vsel %vm256, %v773, %v790
        %796 = vst [vmem:[#allocation3 + $0x100] sm:$0xff] %v785
        %797 = vst [vmem:[#allocation3 + $0x108] sm:$0xff] %v787
        %798 = vst [vmem:[#allocation3 + $0x110] sm:$0xff] %v789
        %799 = vst [vmem:[#allocation3 + $0x118] sm:$0xff] %v791
        %v800 = vld [vmem:[%s1] sm:$0xff]
        %v801 = vld [vmem:[%s1 + $0x8] sm:$0xf]
        %v802 = vld [vmem:[%s1 + $0xc] sm:$0xff]
        %v803 = vld [vmem:[%s1 + $0x14] sm:$0xf]
        %v804 = vld [vmem:[%s1 + $0x18] sm:$0xff]
        %v805 = vld [vmem:[%s1 + $0x20] sm:$0xf]
        %v806 = vld [vmem:[%s1 + $0x24] sm:$0xff]
        %v807 = vld [vmem:[%s1 + $0x2c] sm:$0xf]
        %v808 = vld [vmem:[%s1 + $0x30] sm:$0xff]
        %v809 = vld [vmem:[%s1 + $0x38] sm:$0xf]
        %v810 = vld [vmem:[%s1 + $0x3c] sm:$0xff]
        %v811 = vld [vmem:[%s1 + $0x44] sm:$0xf]
        %v812 = vld [vmem:[%s1 + $0x48] sm:$0xff]
        %v813 = vld [vmem:[%s1 + $0x50] sm:$0xf]
        %v814 = vld [vmem:[%s1 + $0x54] sm:$0xff]
        %v815 = vld [vmem:[%s1 + $0x5c] sm:$0xf]
        %v816 = vld [vmem:[%s1 + $0x60] sm:$0xff]
        %v817 = vld [vmem:[%s1 + $0x68] sm:$0xf]
        %v818 = vld [vmem:[%s1 + $0x6c] sm:$0xff]
        %v819 = vld [vmem:[%s1 + $0x74] sm:$0xf]
        %v820 = vld [vmem:[%s1 + $0x78] sm:$0xff]
        %v821 = vld [vmem:[%s1 + $0x80] sm:$0xf]
        %v822 = vld [vmem:[%s1 + $0x84] sm:$0xff]
        %v823 = vld [vmem:[%s1 + $0x8c] sm:$0xf]
        %v824 = vld [vmem:[%s1 + $0x90] sm:$0xff]
        %v825 = vld [vmem:[%s1 + $0x98] sm:$0xf]
        %v826 = vld [vmem:[%s1 + $0x9c] sm:$0xff]
        %v827 = vld [vmem:[%s1 + $0xa4] sm:$0xf]
        %v828 = vld [vmem:[%s1 + $0xa8] sm:$0xff]
        %v829 = vld [vmem:[%s1 + $0xb0] sm:$0xf]
        %v830 = vld [vmem:[%s1 + $0xb4] sm:$0xff]
        %v831 = vld [vmem:[%s1 + $0xbc] sm:$0xf]
        %v832 = vld [vmem:[%s1 + $0xc0] sm:$0xff]
        %v833 = vld [vmem:[%s1 + $0xc8] sm:$0xf]
        %v834 = vld [vmem:[%s1 + $0xcc] sm:$0xff]
        %v835 = vld [vmem:[%s1 + $0xd4] sm:$0xf]
        %v836 = vld [vmem:[%s1 + $0xd8] sm:$0xff]
        %v837 = vld [vmem:[%s1 + $0xe0] sm:$0xf]
        %v838 = vld [vmem:[%s1 + $0xe4] sm:$0xff]
        %v839 = vld [vmem:[%s1 + $0xec] sm:$0xf]
        %v840 = vld [vmem:[%s1 + $0xf0] sm:$0xff]
        %v841 = vld [vmem:[%s1 + $0xf8] sm:$0xf]
        %v842 = vld [vmem:[%s1 + $0xfc] sm:$0xff]
        %v843 = vld [vmem:[%s1 + $0x104] sm:$0xf]
        %v844 = vld [vmem:[%s1 + $0x108] sm:$0xff]
        %v845 = vld [vmem:[%s1 + $0x110] sm:$0xf]
        %v846 = vld [vmem:[%s1 + $0x114] sm:$0xff]
        %v847 = vld [vmem:[%s1 + $0x11c] sm:$0xf]
        %v848 = vld [vmem:[%s1 + $0x120] sm:$0xff]
        %v849 = vld [vmem:[%s1 + $0x128] sm:$0xf]
        %v850 = vld [vmem:[%s1 + $0x12c] sm:$0xff]
        %v851 = vld [vmem:[%s1 + $0x134] sm:$0xf]
        %v852 = vld [vmem:[%s1 + $0x138] sm:$0xff]
        %v853 = vld [vmem:[%s1 + $0x140] sm:$0xf]
        %v854 = vld [vmem:[%s1 + $0x144] sm:$0xff]
        %v855 = vld [vmem:[%s1 + $0x14c] sm:$0xf]
        %v856 = vld [vmem:[%s1 + $0x150] sm:$0xff]
        %v857 = vld [vmem:[%s1 + $0x158] sm:$0xf]
        %v858 = vld [vmem:[%s1 + $0x15c] sm:$0xff]
        %v859 = vld [vmem:[%s1 + $0x164] sm:$0xf]
        %v860 = vld [vmem:[%s1 + $0x168] sm:$0xff]
        %v861 = vld [vmem:[%s1 + $0x170] sm:$0xf]
        %v862 = vld [vmem:[%s1 + $0x174] sm:$0xff]
        %v863 = vld [vmem:[%s1 + $0x17c] sm:$0xf]
        %v864 = vld [vmem:[#allocation3] sm:$0xff]
        %v865 = vld [vmem:[#allocation3 + $0x8] sm:$0xff]
        %v866 = vld [vmem:[#allocation3 + $0x10] sm:$0xff]
        %v867 = vld [vmem:[#allocation3 + $0x18] sm:$0xff]
        %v868 = vld [vmem:[#allocation3 + $0x20] sm:$0xff]
        %v869 = vld [vmem:[#allocation3 + $0x28] sm:$0xff]
        %v870 = vld [vmem:[#allocation3 + $0x30] sm:$0xff]
        %v871 = vld [vmem:[#allocation3 + $0x38] sm:$0xff]
        %v872 = vld [vmem:[#allocation3 + $0x40] sm:$0xff]
        %v873 = vld [vmem:[#allocation3 + $0x48] sm:$0xff]
        %v874 = vld [vmem:[#allocation3 + $0x50] sm:$0xff]
        %v875 = vld [vmem:[#allocation3 + $0x58] sm:$0xff]
        %v876 = vld [vmem:[#allocation3 + $0x60] sm:$0xff]
        %v877 = vld [vmem:[#allocation3 + $0x68] sm:$0xff]
        %v878 = vld [vmem:[#allocation3 + $0x70] sm:$0xff]
        %v879 = vld [vmem:[#allocation3 + $0x78] sm:$0xff]
        %v880 = vld [vmem:[#allocation3 + $0x80] sm:$0xff]
        %v881 = vld [vmem:[#allocation3 + $0x88] sm:$0xff]
        %v882 = vld [vmem:[#allocation3 + $0x90] sm:$0xff]
        %v883 = vld [vmem:[#allocation3 + $0x98] sm:$0xff]
        %v884 = vld [vmem:[#allocation3 + $0xa0] sm:$0xff]
        %v885 = vld [vmem:[#allocation3 + $0xa8] sm:$0xff]
        %v886 = vld [vmem:[#allocation3 + $0xb0] sm:$0xff]
        %v887 = vld [vmem:[#allocation3 + $0xb8] sm:$0xff]
        %v888 = vld [vmem:[#allocation3 + $0xc0] sm:$0xff]
        %v889 = vld [vmem:[#allocation3 + $0xc8] sm:$0xff]
        %v890 = vld [vmem:[#allocation3 + $0xd0] sm:$0xff]
        %v891 = vld [vmem:[#allocation3 + $0xd8] sm:$0xff]
        %v892 = vld [vmem:[#allocation3 + $0xe0] sm:$0xff]
        %v893 = vld [vmem:[#allocation3 + $0xe8] sm:$0xff]
        %v894 = vld [vmem:[#allocation3 + $0xf0] sm:$0xff]
        %v895 = vld [vmem:[#allocation3 + $0xf8] sm:$0xff]
        %v896 = vld [vmem:[#allocation3 + $0x100] sm:$0xff]
        %v897 = vld [vmem:[#allocation3 + $0x108] sm:$0xff]
        %v898 = vld [vmem:[#allocation3 + $0x110] sm:$0xff]
        %v899 = vld [vmem:[#allocation3 + $0x118] sm:$0xff]
        %v964 = vunpack.c.l.b16 %v800
        %v965 = vunpack.c.h.b16 %v800
        %v966 = vunpack.c.l.b16 %v801
        %v967 = vunpack.c.l.b16 %v802
        %v968 = vunpack.c.h.b16 %v802
        %v969 = vunpack.c.l.b16 %v803
        %v970 = vunpack.c.l.b16 %v804
        %v971 = vunpack.c.h.b16 %v804
        %v972 = vunpack.c.l.b16 %v805
        %v973 = vunpack.c.l.b16 %v806
        %v974 = vunpack.c.h.b16 %v806
        %v975 = vunpack.c.l.b16 %v807
        %v976 = vunpack.c.l.b16 %v808
        %v977 = vunpack.c.h.b16 %v808
        %v978 = vunpack.c.l.b16 %v809
        %v979 = vunpack.c.l.b16 %v810
        %v980 = vunpack.c.h.b16 %v810
        %v981 = vunpack.c.l.b16 %v811
        %v982 = vunpack.c.l.b16 %v812
        %v983 = vunpack.c.h.b16 %v812
        %v984 = vunpack.c.l.b16 %v813
        %v985 = vunpack.c.l.b16 %v814
        %v986 = vunpack.c.h.b16 %v814
        %v987 = vunpack.c.l.b16 %v815
        %v988 = vunpack.c.l.b16 %v816
        %v989 = vunpack.c.h.b16 %v816
        %v990 = vunpack.c.l.b16 %v817
        %v991 = vunpack.c.l.b16 %v818
        %v992 = vunpack.c.h.b16 %v818
        %v993 = vunpack.c.l.b16 %v819
        %v994 = vunpack.c.l.b16 %v820
        %v995 = vunpack.c.h.b16 %v820
        %v996 = vunpack.c.l.b16 %v821
        %v997 = vunpack.c.l.b16 %v822
        %v998 = vunpack.c.h.b16 %v822
        %v999 = vunpack.c.l.b16 %v823
        %v1000 = vunpack.c.l.b16 %v824
        %v1001 = vunpack.c.h.b16 %v824
        %v1002 = vunpack.c.l.b16 %v825
        %v1003 = vunpack.c.l.b16 %v826
        %v1004 = vunpack.c.h.b16 %v826
        %v1005 = vunpack.c.l.b16 %v827
        %v1006 = vunpack.c.l.b16 %v828
        %v1007 = vunpack.c.h.b16 %v828
        %v1008 = vunpack.c.l.b16 %v829
        %v1009 = vunpack.c.l.b16 %v830
        %v1010 = vunpack.c.h.b16 %v830
        %v1011 = vunpack.c.l.b16 %v831
        %v1012 = vunpack.c.l.b16 %v832
        %v1013 = vunpack.c.h.b16 %v832
        %v1014 = vunpack.c.l.b16 %v833
        %v1015 = vunpack.c.l.b16 %v834
        %v1016 = vunpack.c.h.b16 %v834
        %v1017 = vunpack.c.l.b16 %v835
        %v1018 = vunpack.c.l.b16 %v836
        %v1019 = vunpack.c.h.b16 %v836
        %v1020 = vunpack.c.l.b16 %v837
        %v1021 = vunpack.c.l.b16 %v838
        %v1022 = vunpack.c.h.b16 %v838
        %v1023 = vunpack.c.l.b16 %v839
        %v1024 = vunpack.c.l.b16 %v840
        %v1025 = vunpack.c.h.b16 %v840
        %v1026 = vunpack.c.l.b16 %v841
        %v1027 = vunpack.c.l.b16 %v842
        %v1028 = vunpack.c.h.b16 %v842
        %v1029 = vunpack.c.l.b16 %v843
        %v1030 = vunpack.c.l.b16 %v844
        %v1031 = vunpack.c.h.b16 %v844
        %v1032 = vunpack.c.l.b16 %v845
        %v1033 = vunpack.c.l.b16 %v846
        %v1034 = vunpack.c.h.b16 %v846
        %v1035 = vunpack.c.l.b16 %v847
        %v1036 = vunpack.c.l.b16 %v848
        %v1037 = vunpack.c.h.b16 %v848
        %v1038 = vunpack.c.l.b16 %v849
        %v1039 = vunpack.c.l.b16 %v850
        %v1040 = vunpack.c.h.b16 %v850
        %v1041 = vunpack.c.l.b16 %v851
        %v1042 = vunpack.c.l.b16 %v852
        %v1043 = vunpack.c.h.b16 %v852
        %v1044 = vunpack.c.l.b16 %v853
        %v1045 = vunpack.c.l.b16 %v854
        %v1046 = vunpack.c.h.b16 %v854
        %v1047 = vunpack.c.l.b16 %v855
        %v1048 = vunpack.c.l.b16 %v856
        %v1049 = vunpack.c.h.b16 %v856
        %v1050 = vunpack.c.l.b16 %v857
        %v1051 = vunpack.c.l.b16 %v858
        %v1052 = vunpack.c.h.b16 %v858
        %v1053 = vunpack.c.l.b16 %v859
        %v1054 = vunpack.c.l.b16 %v860
        %v1055 = vunpack.c.h.b16 %v860
        %v1056 = vunpack.c.l.b16 %v861
        %v1057 = vunpack.c.l.b16 %v862
        %v1058 = vunpack.c.h.b16 %v862
        %v1059 = vunpack.c.l.b16 %v863
        %v1060 = vpack.c.b16 %v967, %v964
        %v1061 = vpack.c.b16 %v968, %v965
        %v1062 = vpack.c.b16 %v969, %v966
        %v1063 = vpack.c.b16 %v973, %v970
        %v1064 = vpack.c.b16 %v974, %v971
        %v1065 = vpack.c.b16 %v975, %v972
        %v1066 = vpack.c.b16 %v979, %v976
        %v1067 = vpack.c.b16 %v980, %v977
        %v1068 = vpack.c.b16 %v981, %v978
        %v1069 = vpack.c.b16 %v985, %v982
        %v1070 = vpack.c.b16 %v986, %v983
        %v1071 = vpack.c.b16 %v987, %v984
        %v1072 = vpack.c.b16 %v991, %v988
        %v1073 = vpack.c.b16 %v992, %v989
        %v1074 = vpack.c.b16 %v993, %v990
        %v1075 = vpack.c.b16 %v997, %v994
        %v1076 = vpack.c.b16 %v998, %v995
        %v1077 = vpack.c.b16 %v999, %v996
        %v1078 = vpack.c.b16 %v1003, %v1000
        %v1079 = vpack.c.b16 %v1004, %v1001
        %v1080 = vpack.c.b16 %v1005, %v1002
        %v1081 = vpack.c.b16 %v1009, %v1006
        %v1082 = vpack.c.b16 %v1010, %v1007
        %v1083 = vpack.c.b16 %v1011, %v1008
        %v1084 = vpack.c.b16 %v1015, %v1012
        %v1085 = vpack.c.b16 %v1016, %v1013
        %v1086 = vpack.c.b16 %v1017, %v1014
        %v1087 = vpack.c.b16 %v1021, %v1018
        %v1088 = vpack.c.b16 %v1022, %v1019
        %v1089 = vpack.c.b16 %v1023, %v1020
        %v1090 = vpack.c.b16 %v1027, %v1024
        %v1091 = vpack.c.b16 %v1028, %v1025
        %v1092 = vpack.c.b16 %v1029, %v1026
        %v1093 = vpack.c.b16 %v1033, %v1030
        %v1094 = vpack.c.b16 %v1034, %v1031
        %v1095 = vpack.c.b16 %v1035, %v1032
        %v1096 = vpack.c.b16 %v1039, %v1036
        %v1097 = vpack.c.b16 %v1040, %v1037
        %v1098 = vpack.c.b16 %v1041, %v1038
        %v1099 = vpack.c.b16 %v1045, %v1042
        %v1100 = vpack.c.b16 %v1046, %v1043
        %v1101 = vpack.c.b16 %v1047, %v1044
        %v1102 = vpack.c.b16 %v1051, %v1048
        %v1103 = vpack.c.b16 %v1052, %v1049
        %v1104 = vpack.c.b16 %v1053, %v1050
        %v1105 = vpack.c.b16 %v1057, %v1054
        %v1106 = vpack.c.b16 %v1058, %v1055
        %v1107 = vpack.c.b16 %v1059, %v1056
        %v1176 = vunpack.c.l.b16 %v864
        %v1177 = vunpack.c.h.b16 %v864
        %v1178 = vunpack.c.l.b16 %v865
        %v1179 = vunpack.c.h.b16 %v865
        %v1180 = vunpack.c.l.b16 %v866
        %v1181 = vunpack.c.h.b16 %v866
        %v1182 = vunpack.c.l.b16 %v867
        %v1183 = vunpack.c.h.b16 %v867
        %v1184 = vunpack.c.l.b16 %v868
        %v1185 = vunpack.c.h.b16 %v868
        %v1186 = vunpack.c.l.b16 %v869
        %v1187 = vunpack.c.h.b16 %v869
        %v1188 = vunpack.c.l.b16 %v870
        %v1189 = vunpack.c.h.b16 %v870
        %v1190 = vunpack.c.l.b16 %v871
        %v1191 = vunpack.c.h.b16 %v871
        %v1192 = vunpack.c.l.b16 %v872
        %v1193 = vunpack.c.h.b16 %v872
        %v1194 = vunpack.c.l.b16 %v873
        %v1195 = vunpack.c.h.b16 %v873
        %v1196 = vunpack.c.l.b16 %v874
        %v1197 = vunpack.c.h.b16 %v874
        %v1198 = vunpack.c.l.b16 %v875
        %v1199 = vunpack.c.h.b16 %v875
        %v1200 = vunpack.c.l.b16 %v876
        %v1201 = vunpack.c.h.b16 %v876
        %v1202 = vunpack.c.l.b16 %v877
        %v1203 = vunpack.c.h.b16 %v877
        %v1204 = vunpack.c.l.b16 %v878
        %v1205 = vunpack.c.h.b16 %v878
        %v1206 = vunpack.c.l.b16 %v879
        %v1207 = vunpack.c.h.b16 %v879
        %v1208 = vunpack.c.l.b16 %v880
        %v1209 = vunpack.c.h.b16 %v880
        %v1210 = vunpack.c.l.b16 %v881
        %v1211 = vunpack.c.h.b16 %v881
        %v1212 = vunpack.c.l.b16 %v882
        %v1213 = vunpack.c.h.b16 %v882
        %v1214 = vunpack.c.l.b16 %v883
        %v1215 = vunpack.c.h.b16 %v883
        %v1216 = vunpack.c.l.b16 %v884
        %v1217 = vunpack.c.h.b16 %v884
        %v1218 = vunpack.c.l.b16 %v885
        %v1219 = vunpack.c.h.b16 %v885
        %v1220 = vunpack.c.l.b16 %v886
        %v1221 = vunpack.c.h.b16 %v886
        %v1222 = vunpack.c.l.b16 %v887
        %v1223 = vunpack.c.h.b16 %v887
        %v1224 = vunpack.c.l.b16 %v888
        %v1225 = vunpack.c.h.b16 %v888
        %v1226 = vunpack.c.l.b16 %v889
        %v1227 = vunpack.c.h.b16 %v889
        %v1228 = vunpack.c.l.b16 %v890
        %v1229 = vunpack.c.h.b16 %v890
        %v1230 = vunpack.c.l.b16 %v891
        %v1231 = vunpack.c.h.b16 %v891
        %v1232 = vunpack.c.l.b16 %v892
        %v1233 = vunpack.c.h.b16 %v892
        %v1234 = vunpack.c.l.b16 %v893
        %v1235 = vunpack.c.h.b16 %v893
        %v1236 = vunpack.c.l.b16 %v894
        %v1237 = vunpack.c.h.b16 %v894
        %v1238 = vunpack.c.l.b16 %v895
        %v1239 = vunpack.c.h.b16 %v895
        %v1240 = vunpack.c.l.b16 %v896
        %v1241 = vunpack.c.h.b16 %v896
        %v1242 = vunpack.c.l.b16 %v897
        %v1243 = vunpack.c.h.b16 %v897
        %v1244 = vunpack.c.l.b16 %v898
        %v1245 = vunpack.c.h.b16 %v898
        %v1246 = vunpack.c.l.b16 %v899
        %v1247 = vunpack.c.h.b16 %v899
        %v1248 = vpack.c.b16 %v1178, %v1176
        %v1249 = vpack.c.b16 %v1179, %v1177
        %v1250 = vpack.c.b16 %v1182, %v1180
        %v1251 = vpack.c.b16 %v1183, %v1181
        %v1252 = vpack.c.b16 %v1186, %v1184
        %v1253 = vpack.c.b16 %v1187, %v1185
        %v1254 = vpack.c.b16 %v1190, %v1188
        %v1255 = vpack.c.b16 %v1191, %v1189
        %v1256 = vpack.c.b16 %v1194, %v1192
        %v1257 = vpack.c.b16 %v1195, %v1193
        %v1258 = vpack.c.b16 %v1198, %v1196
        %v1259 = vpack.c.b16 %v1199, %v1197
        %v1260 = vpack.c.b16 %v1202, %v1200
        %v1261 = vpack.c.b16 %v1203, %v1201
        %v1262 = vpack.c.b16 %v1206, %v1204
        %v1263 = vpack.c.b16 %v1207, %v1205
        %v1264 = vpack.c.b16 %v1210, %v1208
        %v1265 = vpack.c.b16 %v1211, %v1209
        %v1266 = vpack.c.b16 %v1214, %v1212
        %v1267 = vpack.c.b16 %v1215, %v1213
        %v1268 = vpack.c.b16 %v1218, %v1216
        %v1269 = vpack.c.b16 %v1219, %v1217
        %v1270 = vpack.c.b16 %v1222, %v1220
        %v1271 = vpack.c.b16 %v1223, %v1221
        %v1272 = vpack.c.b16 %v1226, %v1224
        %v1273 = vpack.c.b16 %v1227, %v1225
        %v1274 = vpack.c.b16 %v1230, %v1228
        %v1275 = vpack.c.b16 %v1231, %v1229
        %v1276 = vpack.c.b16 %v1234, %v1232
        %v1277 = vpack.c.b16 %v1235, %v1233
        %v1278 = vpack.c.b16 %v1238, %v1236
        %v1279 = vpack.c.b16 %v1239, %v1237
        %v1280 = vpack.c.b16 %v1242, %v1240
        %v1281 = vpack.c.b16 %v1243, %v1241
        %v1282 = vpack.c.b16 %v1246, %v1244
        %v1283 = vpack.c.b16 %v1247, %v1245
        %vm1320 = vcmask 261120
        %v1322 = vsel %vm1320, %v1062, 0
        %v1325 = vsel %vm1320, %v1065, 0
        %v1328 = vsel %vm1320, %v1068, 0
        %v1331 = vsel %vm1320, %v1071, 0
        %v1334 = vsel %vm1320, %v1074, 0
        %v1337 = vsel %vm1320, %v1077, 0
        %v1340 = vsel %vm1320, %v1080, 0
        %v1343 = vsel %vm1320, %v1083, 0
        %v1346 = vsel %vm1320, %v1086, 0
        %v1349 = vsel %vm1320, %v1089, 0
        %v1352 = vsel %vm1320, %v1092, 0
        %v1355 = vsel %vm1320, %v1095, 0
        %v1358 = vsel %vm1320, %v1098, 0
        %v1361 = vsel %vm1320, %v1101, 0
        %v1364 = vsel %vm1320, %v1104, 0
        %v1367 = vsel %vm1320, %v1107, 0
        %1369 = vmatprep.subr.bf16.mxu0 %v1263
        %1370 = vmatpush1.bf16.msra.mxu0 %v1262
        %1371 = vmatprep.subr.bf16.mxu0 %v1261
        %1372 = vmatpush1.bf16.msra.mxu0 %v1260
        %1373 = vmatprep.subr.bf16.mxu0 %v1259
        %1374 = vmatpush1.bf16.msra.mxu0 %v1258
        %1375 = vmatprep.subr.bf16.mxu0 %v1257
        %1376 = vmatpush1.bf16.msra.mxu0 %v1256
        %1377 = vmatprep.subr.bf16.mxu0 %v1255
        %1378 = vmatpush1.bf16.msra.mxu0 %v1254
        %1379 = vmatprep.subr.bf16.mxu0 %v1253
        %1380 = vmatpush1.bf16.msra.mxu0 %v1252
        %1381 = vmatprep.subr.bf16.mxu0 %v1251
        %1382 = vmatpush1.bf16.msra.mxu0 %v1250
        %1383 = vmatprep.subr.bf16.mxu0 %v1249
        %1384 = vmatpush1.bf16.msra.mxu0 %v1248
        %1385 = vmatprep.subr.bf16.mxu0 %v1279
        %1386 = vmatpush2.bf16.msra.mxu0 %v1278
        %1387 = vmatprep.subr.bf16.mxu0 %v1277
        %1388 = vmatpush2.bf16.msra.mxu0 %v1276
        %1389 = vmatprep.subr.bf16.mxu0 %v1275
        %1390 = vmatpush2.bf16.msra.mxu0 %v1274
        %1391 = vmatprep.subr.bf16.mxu0 %v1273
        %1392 = vmatpush2.bf16.msra.mxu0 %v1272
        %1393 = vmatprep.subr.bf16.mxu0 %v1271
        %1394 = vmatpush2.bf16.msra.mxu0 %v1270
        %1395 = vmatprep.subr.bf16.mxu0 %v1269
        %1396 = vmatpush2.bf16.msra.mxu0 %v1268
        %1397 = vmatprep.subr.bf16.mxu0 %v1267
        %1398 = vmatpush2.bf16.msra.mxu0 %v1266
        %1399 = vmatprep.subr.bf16.mxu0 %v1265
        %1400 = vmatpush2.bf16.msra.mxu0 %v1264
        %1401 = vmatprep.mubr.bf16.mxu0 %v1061
        %1402 = vmatmul.mubr.bf16.gmra.mxu0 %v1060
        %v1403 = vpop.f32.mrf.mxu0
        %v1404 = vadd.f32 0.0, %v1403
        %v1405 = vpop.f32.mrf.mxu0
        %v1406 = vadd.f32 0.0, %v1405
        %v1407 = vpop.f32.mrf.mxu0
        %v1408 = vadd.f32 0.0, %v1407
        %v1409 = vpop.f32.mrf.mxu0
        %v1410 = vadd.f32 0.0, %v1409
        %1411 = vmatprep.mubr.bf16.mxu0 %v1064
        %1412 = vmatmul.mubr.bf16.gmra.mxu0 %v1063
        %v1413 = vpop.f32.mrf.mxu0
        %v1414 = vadd.f32 0.0, %v1413
        %v1415 = vpop.f32.mrf.mxu0
        %v1416 = vadd.f32 0.0, %v1415
        %v1417 = vpop.f32.mrf.mxu0
        %v1418 = vadd.f32 0.0, %v1417
        %v1419 = vpop.f32.mrf.mxu0
        %v1420 = vadd.f32 0.0, %v1419
        %1421 = vmatprep.mubr.bf16.mxu0 %v1067
        %1422 = vmatmul.mubr.bf16.gmra.mxu0 %v1066
        %v1423 = vpop.f32.mrf.mxu0
        %v1424 = vadd.f32 0.0, %v1423
        %v1425 = vpop.f32.mrf.mxu0
        %v1426 = vadd.f32 0.0, %v1425
        %v1427 = vpop.f32.mrf.mxu0
        %v1428 = vadd.f32 0.0, %v1427
        %v1429 = vpop.f32.mrf.mxu0
        %v1430 = vadd.f32 0.0, %v1429
        %1431 = vmatprep.mubr.bf16.mxu0 %v1070
        %1432 = vmatmul.mubr.bf16.gmra.mxu0 %v1069
        %v1433 = vpop.f32.mrf.mxu0
        %v1434 = vadd.f32 0.0, %v1433
        %v1435 = vpop.f32.mrf.mxu0
        %v1436 = vadd.f32 0.0, %v1435
        %v1437 = vpop.f32.mrf.mxu0
        %v1438 = vadd.f32 0.0, %v1437
        %v1439 = vpop.f32.mrf.mxu0
        %v1440 = vadd.f32 0.0, %v1439
        %1441 = vmatprep.mubr.bf16.mxu0 %v1073
        %1442 = vmatmul.mubr.bf16.gmra.mxu0 %v1072
        %v1443 = vpop.f32.mrf.mxu0
        %v1444 = vadd.f32 0.0, %v1443
        %v1445 = vpop.f32.mrf.mxu0
        %v1446 = vadd.f32 0.0, %v1445
        %v1447 = vpop.f32.mrf.mxu0
        %v1448 = vadd.f32 0.0, %v1447
        %v1449 = vpop.f32.mrf.mxu0
        %v1450 = vadd.f32 0.0, %v1449
        %1451 = vmatprep.mubr.bf16.mxu0 %v1076
        %1452 = vmatmul.mubr.bf16.gmra.mxu0 %v1075
        %v1453 = vpop.f32.mrf.mxu0
        %v1454 = vadd.f32 0.0, %v1453
        %v1455 = vpop.f32.mrf.mxu0
        %v1456 = vadd.f32 0.0, %v1455
        %v1457 = vpop.f32.mrf.mxu0
        %v1458 = vadd.f32 0.0, %v1457
        %v1459 = vpop.f32.mrf.mxu0
        %v1460 = vadd.f32 0.0, %v1459
        %1461 = vmatprep.mubr.bf16.mxu0 %v1079
        %1462 = vmatmul.mubr.bf16.gmra.mxu0 %v1078
        %v1463 = vpop.f32.mrf.mxu0
        %v1464 = vadd.f32 0.0, %v1463
        %v1465 = vpop.f32.mrf.mxu0
        %v1466 = vadd.f32 0.0, %v1465
        %v1467 = vpop.f32.mrf.mxu0
        %v1468 = vadd.f32 0.0, %v1467
        %v1469 = vpop.f32.mrf.mxu0
        %v1470 = vadd.f32 0.0, %v1469
        %1471 = vmatprep.mubr.bf16.mxu0 %v1082
        %1472 = vmatmul.mubr.bf16.gmra.mxu0 %v1081
        %v1473 = vpop.f32.mrf.mxu0
        %v1474 = vadd.f32 0.0, %v1473
        %v1475 = vpop.f32.mrf.mxu0
        %v1476 = vadd.f32 0.0, %v1475
        %v1477 = vpop.f32.mrf.mxu0
        %v1478 = vadd.f32 0.0, %v1477
        %v1479 = vpop.f32.mrf.mxu0
        %v1480 = vadd.f32 0.0, %v1479
        %1481 = vmatprep.mubr.bf16.mxu0 %v1085
        %1482 = vmatmul.mubr.bf16.gmra.mxu0 %v1084
        %v1483 = vpop.f32.mrf.mxu0
        %v1484 = vadd.f32 0.0, %v1483
        %v1485 = vpop.f32.mrf.mxu0
        %v1486 = vadd.f32 0.0, %v1485
        %v1487 = vpop.f32.mrf.mxu0
        %v1488 = vadd.f32 0.0, %v1487
        %v1489 = vpop.f32.mrf.mxu0
        %v1490 = vadd.f32 0.0, %v1489
        %1491 = vmatprep.mubr.bf16.mxu0 %v1088
        %1492 = vmatmul.mubr.bf16.gmra.mxu0 %v1087
        %v1493 = vpop.f32.mrf.mxu0
        %v1494 = vadd.f32 0.0, %v1493
        %v1495 = vpop.f32.mrf.mxu0
        %v1496 = vadd.f32 0.0, %v1495
        %v1497 = vpop.f32.mrf.mxu0
        %v1498 = vadd.f32 0.0, %v1497
        %v1499 = vpop.f32.mrf.mxu0
        %v1500 = vadd.f32 0.0, %v1499
        %1501 = vmatprep.mubr.bf16.mxu0 %v1091
        %1502 = vmatmul.mubr.bf16.gmra.mxu0 %v1090
        %v1503 = vpop.f32.mrf.mxu0
        %v1504 = vadd.f32 0.0, %v1503
        %v1505 = vpop.f32.mrf.mxu0
        %v1506 = vadd.f32 0.0, %v1505
        %v1507 = vpop.f32.mrf.mxu0
        %v1508 = vadd.f32 0.0, %v1507
        %v1509 = vpop.f32.mrf.mxu0
        %v1510 = vadd.f32 0.0, %v1509
        %1511 = vmatprep.mubr.bf16.mxu0 %v1094
        %1512 = vmatmul.mubr.bf16.gmra.mxu0 %v1093
        %v1513 = vpop.f32.mrf.mxu0
        %v1514 = vadd.f32 0.0, %v1513
        %v1515 = vpop.f32.mrf.mxu0
        %v1516 = vadd.f32 0.0, %v1515
        %v1517 = vpop.f32.mrf.mxu0
        %v1518 = vadd.f32 0.0, %v1517
        %v1519 = vpop.f32.mrf.mxu0
        %v1520 = vadd.f32 0.0, %v1519
        %1521 = vmatprep.mubr.bf16.mxu0 %v1097
        %1522 = vmatmul.mubr.bf16.gmra.mxu0 %v1096
        %v1523 = vpop.f32.mrf.mxu0
        %v1524 = vadd.f32 0.0, %v1523
        %v1525 = vpop.f32.mrf.mxu0
        %v1526 = vadd.f32 0.0, %v1525
        %v1527 = vpop.f32.mrf.mxu0
        %v1528 = vadd.f32 0.0, %v1527
        %v1529 = vpop.f32.mrf.mxu0
        %v1530 = vadd.f32 0.0, %v1529
        %1531 = vmatprep.mubr.bf16.mxu0 %v1100
        %1532 = vmatmul.mubr.bf16.gmra.mxu0 %v1099
        %v1533 = vpop.f32.mrf.mxu0
        %v1534 = vadd.f32 0.0, %v1533
        %v1535 = vpop.f32.mrf.mxu0
        %v1536 = vadd.f32 0.0, %v1535
        %v1537 = vpop.f32.mrf.mxu0
        %v1538 = vadd.f32 0.0, %v1537
        %v1539 = vpop.f32.mrf.mxu0
        %v1540 = vadd.f32 0.0, %v1539
        %1541 = vmatprep.mubr.bf16.mxu0 %v1103
        %1542 = vmatmul.mubr.bf16.gmra.mxu0 %v1102
        %v1543 = vpop.f32.mrf.mxu0
        %v1544 = vadd.f32 0.0, %v1543
        %v1545 = vpop.f32.mrf.mxu0
        %v1546 = vadd.f32 0.0, %v1545
        %v1547 = vpop.f32.mrf.mxu0
        %v1548 = vadd.f32 0.0, %v1547
        %v1549 = vpop.f32.mrf.mxu0
        %v1550 = vadd.f32 0.0, %v1549
        %1551 = vmatprep.mubr.bf16.mxu0 %v1106
        %1552 = vmatmul.mubr.bf16.gmra.mxu0 %v1105
        %v1553 = vpop.f32.mrf.mxu0
        %v1554 = vadd.f32 0.0, %v1553
        %v1555 = vpop.f32.mrf.mxu0
        %v1556 = vadd.f32 0.0, %v1555
        %v1557 = vpop.f32.mrf.mxu0
        %v1558 = vadd.f32 0.0, %v1557
        %v1559 = vpop.f32.mrf.mxu0
        %v1560 = vadd.f32 0.0, %v1559
        %1561 = vdwg.mxu0
        %1562 = vmatprep.subr.bf16.mxu0 0
        %1563 = vmatpush1.bf16.msra.mxu0 0
        %1564 = vmatprep.subr.bf16.mxu0 0
        %1565 = vmatpush1.bf16.msra.mxu0 0
        %1566 = vmatprep.subr.bf16.mxu0 0
        %1567 = vmatpush1.bf16.msra.mxu0 0
        %1568 = vmatprep.subr.bf16.mxu0 0
        %1569 = vmatpush1.bf16.msra.mxu0 0
        %1570 = vmatprep.subr.bf16.mxu0 0
        %1571 = vmatpush1.bf16.msra.mxu0 0
        %1572 = vmatprep.subr.bf16.mxu0 0
        %1573 = vmatpush1.bf16.msra.mxu0 0
        %1574 = vmatprep.subr.bf16.mxu0 %v1283
        %1575 = vmatpush1.bf16.msra.mxu0 %v1282
        %1576 = vmatprep.subr.bf16.mxu0 %v1281
        %1577 = vmatpush1.bf16.msra.mxu0 %v1280
        %1578 = vmatprep.subr.bf16.mxu0 0
        %1579 = vmatpush2.bf16.msra.mxu0 0
        %1580 = vmatprep.subr.bf16.mxu0 0
        %1581 = vmatpush2.bf16.msra.mxu0 0
        %1582 = vmatprep.subr.bf16.mxu0 0
        %1583 = vmatpush2.bf16.msra.mxu0 0
        %1584 = vmatprep.subr.bf16.mxu0 0
        %1585 = vmatpush2.bf16.msra.mxu0 0
        %1586 = vmatprep.subr.bf16.mxu0 0
        %1587 = vmatpush2.bf16.msra.mxu0 0
        %1588 = vmatprep.subr.bf16.mxu0 0
        %1589 = vmatpush2.bf16.msra.mxu0 0
        %1590 = vmatprep.subr.bf16.mxu0 0
        %1591 = vmatpush2.bf16.msra.mxu0 0
        %1592 = vmatprep.subr.bf16.mxu0 0
        %1593 = vmatpush2.bf16.msra.mxu0 0
        %1594 = vmatprep.mubr.bf16.mxu0 0
        %1595 = vmatmul.mubr.bf16.gmra.mxu0 %v1322
        %v1596 = vpop.f32.mrf.mxu0
        %v1597 = vadd.f32 %v1404, %v1596
        %v1598 = vpop.f32.mrf.mxu0
        %v1599 = vadd.f32 %v1406, %v1598
        %v1600 = vpop.f32.mrf.mxu0
        %v1601 = vadd.f32 %v1408, %v1600
        %v1602 = vpop.f32.mrf.mxu0
        %v1603 = vadd.f32 %v1410, %v1602
        %1604 = vmatprep.mubr.bf16.mxu0 0
        %1605 = vmatmul.mubr.bf16.gmra.mxu0 %v1325
        %v1606 = vpop.f32.mrf.mxu0
        %v1607 = vadd.f32 %v1414, %v1606
        %v1608 = vpop.f32.mrf.mxu0
        %v1609 = vadd.f32 %v1416, %v1608
        %v1610 = vpop.f32.mrf.mxu0
        %v1611 = vadd.f32 %v1418, %v1610
        %v1612 = vpop.f32.mrf.mxu0
        %v1613 = vadd.f32 %v1420, %v1612
        %1614 = vmatprep.mubr.bf16.mxu0 0
        %1615 = vmatmul.mubr.bf16.gmra.mxu0 %v1328
        %v1616 = vpop.f32.mrf.mxu0
        %v1617 = vadd.f32 %v1424, %v1616
        %v1618 = vpop.f32.mrf.mxu0
        %v1619 = vadd.f32 %v1426, %v1618
        %v1620 = vpop.f32.mrf.mxu0
        %v1621 = vadd.f32 %v1428, %v1620
        %v1622 = vpop.f32.mrf.mxu0
        %v1623 = vadd.f32 %v1430, %v1622
        %1624 = vmatprep.mubr.bf16.mxu0 0
        %1625 = vmatmul.mubr.bf16.gmra.mxu0 %v1331
        %v1626 = vpop.f32.mrf.mxu0
        %v1627 = vadd.f32 %v1434, %v1626
        %v1628 = vpop.f32.mrf.mxu0
        %v1629 = vadd.f32 %v1436, %v1628
        %v1630 = vpop.f32.mrf.mxu0
        %v1631 = vadd.f32 %v1438, %v1630
        %v1632 = vpop.f32.mrf.mxu0
        %v1633 = vadd.f32 %v1440, %v1632
        %1634 = vmatprep.mubr.bf16.mxu0 0
        %1635 = vmatmul.mubr.bf16.gmra.mxu0 %v1334
        %v1636 = vpop.f32.mrf.mxu0
        %v1637 = vadd.f32 %v1444, %v1636
        %v1638 = vpop.f32.mrf.mxu0
        %v1639 = vadd.f32 %v1446, %v1638
        %v1640 = vpop.f32.mrf.mxu0
        %v1641 = vadd.f32 %v1448, %v1640
        %v1642 = vpop.f32.mrf.mxu0
        %v1643 = vadd.f32 %v1450, %v1642
        %1644 = vmatprep.mubr.bf16.mxu0 0
        %1645 = vmatmul.mubr.bf16.gmra.mxu0 %v1337
        %v1646 = vpop.f32.mrf.mxu0
        %v1647 = vadd.f32 %v1454, %v1646
        %v1648 = vpop.f32.mrf.mxu0
        %v1649 = vadd.f32 %v1456, %v1648
        %v1650 = vpop.f32.mrf.mxu0
        %v1651 = vadd.f32 %v1458, %v1650
        %v1652 = vpop.f32.mrf.mxu0
        %v1653 = vadd.f32 %v1460, %v1652
        %1654 = vmatprep.mubr.bf16.mxu0 0
        %1655 = vmatmul.mubr.bf16.gmra.mxu0 %v1340
        %v1656 = vpop.f32.mrf.mxu0
        %v1657 = vadd.f32 %v1464, %v1656
        %v1658 = vpop.f32.mrf.mxu0
        %v1659 = vadd.f32 %v1466, %v1658
        %v1660 = vpop.f32.mrf.mxu0
        %v1661 = vadd.f32 %v1468, %v1660
        %v1662 = vpop.f32.mrf.mxu0
        %v1663 = vadd.f32 %v1470, %v1662
        %1664 = vmatprep.mubr.bf16.mxu0 0
        %1665 = vmatmul.mubr.bf16.gmra.mxu0 %v1343
        %v1666 = vpop.f32.mrf.mxu0
        %v1667 = vadd.f32 %v1474, %v1666
        %v1668 = vpop.f32.mrf.mxu0
        %v1669 = vadd.f32 %v1476, %v1668
        %v1670 = vpop.f32.mrf.mxu0
        %v1671 = vadd.f32 %v1478, %v1670
        %v1672 = vpop.f32.mrf.mxu0
        %v1673 = vadd.f32 %v1480, %v1672
        %1674 = vmatprep.mubr.bf16.mxu0 0
        %1675 = vmatmul.mubr.bf16.gmra.mxu0 %v1346
        %v1676 = vpop.f32.mrf.mxu0
        %v1677 = vadd.f32 %v1484, %v1676
        %v1678 = vpop.f32.mrf.mxu0
        %v1679 = vadd.f32 %v1486, %v1678
        %v1680 = vpop.f32.mrf.mxu0
        %v1681 = vadd.f32 %v1488, %v1680
        %v1682 = vpop.f32.mrf.mxu0
        %v1683 = vadd.f32 %v1490, %v1682
        %1684 = vmatprep.mubr.bf16.mxu0 0
        %1685 = vmatmul.mubr.bf16.gmra.mxu0 %v1349
        %v1686 = vpop.f32.mrf.mxu0
        %v1687 = vadd.f32 %v1494, %v1686
        %v1688 = vpop.f32.mrf.mxu0
        %v1689 = vadd.f32 %v1496, %v1688
        %v1690 = vpop.f32.mrf.mxu0
        %v1691 = vadd.f32 %v1498, %v1690
        %v1692 = vpop.f32.mrf.mxu0
        %v1693 = vadd.f32 %v1500, %v1692
        %1694 = vmatprep.mubr.bf16.mxu0 0
        %1695 = vmatmul.mubr.bf16.gmra.mxu0 %v1352
        %v1696 = vpop.f32.mrf.mxu0
        %v1697 = vadd.f32 %v1504, %v1696
        %v1698 = vpop.f32.mrf.mxu0
        %v1699 = vadd.f32 %v1506, %v1698
        %v1700 = vpop.f32.mrf.mxu0
        %v1701 = vadd.f32 %v1508, %v1700
        %v1702 = vpop.f32.mrf.mxu0
        %v1703 = vadd.f32 %v1510, %v1702
        %1704 = vmatprep.mubr.bf16.mxu0 0
        %1705 = vmatmul.mubr.bf16.gmra.mxu0 %v1355
        %v1706 = vpop.f32.mrf.mxu0
        %v1707 = vadd.f32 %v1514, %v1706
        %v1708 = vpop.f32.mrf.mxu0
        %v1709 = vadd.f32 %v1516, %v1708
        %v1710 = vpop.f32.mrf.mxu0
        %v1711 = vadd.f32 %v1518, %v1710
        %v1712 = vpop.f32.mrf.mxu0
        %v1713 = vadd.f32 %v1520, %v1712
        %1714 = vmatprep.mubr.bf16.mxu0 0
        %1715 = vmatmul.mubr.bf16.gmra.mxu0 %v1358
        %v1716 = vpop.f32.mrf.mxu0
        %v1717 = vadd.f32 %v1524, %v1716
        %v1718 = vpop.f32.mrf.mxu0
        %v1719 = vadd.f32 %v1526, %v1718
        %v1720 = vpop.f32.mrf.mxu0
        %v1721 = vadd.f32 %v1528, %v1720
        %v1722 = vpop.f32.mrf.mxu0
        %v1723 = vadd.f32 %v1530, %v1722
        %1724 = vmatprep.mubr.bf16.mxu0 0
        %1725 = vmatmul.mubr.bf16.gmra.mxu0 %v1361
        %v1726 = vpop.f32.mrf.mxu0
        %v1727 = vadd.f32 %v1534, %v1726
        %v1728 = vpop.f32.mrf.mxu0
        %v1729 = vadd.f32 %v1536, %v1728
        %v1730 = vpop.f32.mrf.mxu0
        %v1731 = vadd.f32 %v1538, %v1730
        %v1732 = vpop.f32.mrf.mxu0
        %v1733 = vadd.f32 %v1540, %v1732
        %1734 = vmatprep.mubr.bf16.mxu0 0
        %1735 = vmatmul.mubr.bf16.gmra.mxu0 %v1364
        %v1736 = vpop.f32.mrf.mxu0
        %v1737 = vadd.f32 %v1544, %v1736
        %v1738 = vpop.f32.mrf.mxu0
        %v1739 = vadd.f32 %v1546, %v1738
        %v1740 = vpop.f32.mrf.mxu0
        %v1741 = vadd.f32 %v1548, %v1740
        %v1742 = vpop.f32.mrf.mxu0
        %v1743 = vadd.f32 %v1550, %v1742
        %1744 = vmatprep.mubr.bf16.mxu0 0
        %1745 = vmatmul.mubr.bf16.gmra.mxu0 %v1367
        %v1746 = vpop.f32.mrf.mxu0
        %v1747 = vadd.f32 %v1554, %v1746
        %v1748 = vpop.f32.mrf.mxu0
        %v1749 = vadd.f32 %v1556, %v1748
        %v1750 = vpop.f32.mrf.mxu0
        %v1751 = vadd.f32 %v1558, %v1750
        %v1752 = vpop.f32.mrf.mxu0
        %v1753 = vadd.f32 %v1560, %v1752
        %1754 = vdwg.mxu0
        %v1755 = vpack.c.bf16 %v1601, %v1597
        %v1756 = vpack.c.bf16 %v1603, %v1599
        %v1757 = vpack.c.bf16 %v1611, %v1607
        %v1758 = vpack.c.bf16 %v1613, %v1609
        %v1759 = vpack.c.bf16 %v1621, %v1617
        %v1760 = vpack.c.bf16 %v1623, %v1619
        %v1761 = vpack.c.bf16 %v1631, %v1627
        %v1762 = vpack.c.bf16 %v1633, %v1629
        %v1763 = vpack.c.bf16 %v1641, %v1637
        %v1764 = vpack.c.bf16 %v1643, %v1639
        %v1765 = vpack.c.bf16 %v1651, %v1647
        %v1766 = vpack.c.bf16 %v1653, %v1649
        %v1767 = vpack.c.bf16 %v1661, %v1657
        %v1768 = vpack.c.bf16 %v1663, %v1659
        %v1769 = vpack.c.bf16 %v1671, %v1667
        %v1770 = vpack.c.bf16 %v1673, %v1669
        %v1771 = vpack.c.bf16 %v1681, %v1677
        %v1772 = vpack.c.bf16 %v1683, %v1679
        %v1773 = vpack.c.bf16 %v1691, %v1687
        %v1774 = vpack.c.bf16 %v1693, %v1689
        %v1775 = vpack.c.bf16 %v1701, %v1697
        %v1776 = vpack.c.bf16 %v1703, %v1699
        %v1777 = vpack.c.bf16 %v1711, %v1707
        %v1778 = vpack.c.bf16 %v1713, %v1709
        %v1779 = vpack.c.bf16 %v1721, %v1717
        %v1780 = vpack.c.bf16 %v1723, %v1719
        %v1781 = vpack.c.bf16 %v1731, %v1727
        %v1782 = vpack.c.bf16 %v1733, %v1729
        %v1783 = vpack.c.bf16 %v1741, %v1737
        %v1784 = vpack.c.bf16 %v1743, %v1739
        %v1785 = vpack.c.bf16 %v1751, %v1747
        %v1786 = vpack.c.bf16 %v1753, %v1749
        %1787 = vmatprep.subr.bf16.mxu0 %v1786
        %1788 = vmatpush1.bf16.xpose.msra.mxu0 %v1785
        %1789 = vmatprep.subr.bf16.mxu0 %v1784
        %1790 = vmatpush1.bf16.xpose.msra.mxu0 %v1783
        %1791 = vmatprep.subr.bf16.mxu0 %v1782
        %1792 = vmatpush1.bf16.xpose.msra.mxu0 %v1781
        %1793 = vmatprep.subr.bf16.mxu0 %v1780
        %1794 = vmatpush1.bf16.xpose.msra.mxu0 %v1779
        %1795 = vmatprep.subr.bf16.mxu0 %v1778
        %1796 = vmatpush1.bf16.xpose.msra.mxu0 %v1777
        %1797 = vmatprep.subr.bf16.mxu0 %v1776
        %1798 = vmatpush1.bf16.xpose.msra.mxu0 %v1775
        %1799 = vmatprep.subr.bf16.mxu0 %v1774
        %1800 = vmatpush1.bf16.xpose.msra.mxu0 %v1773
        %1801 = vmatprep.subr.bf16.mxu0 %v1772
        %1802 = vmatpush1.bf16.xpose.msra.mxu0 %v1771
        %1803 = vmatprep.subr.bf16.mxu0 0
        %1804 = vmatpush2.bf16.xpose.msra.mxu0 0
        %1805 = vmatprep.subr.bf16.mxu0 0
        %1806 = vmatpush2.bf16.xpose.msra.mxu0 0
        %1807 = vmatprep.subr.bf16.mxu0 0
        %1808 = vmatpush2.bf16.xpose.msra.mxu0 0
        %1809 = vmatprep.subr.bf16.mxu0 0
        %1810 = vmatpush2.bf16.xpose.msra.mxu0 0
        %1811 = vmatprep.subr.bf16.mxu0 0
        %1812 = vmatpush2.bf16.xpose.msra.mxu0 0
        %1813 = vmatprep.subr.bf16.mxu0 0
        %1814 = vmatpush2.bf16.xpose.msra.mxu0 0
        %1815 = vmatprep.subr.bf16.mxu0 0
        %1816 = vmatpush2.bf16.xpose.msra.mxu0 0
        %1817 = vmatprep.subr.bf16.mxu0 0
        %1818 = vmatpush2.bf16.xpose.msra.mxu0 0
        %1819 = vmatprep.mubr.bf16.mxu0 %v1756
        %1820 = vmatmul.mubr.bf16.gmra.mxu0 %v1755
        %v1821 = vpop.f32.mrf.mxu0
        %v1822 = vadd.f32 0.0, %v1821
        %v1823 = vpop.f32.mrf.mxu0
        %v1824 = vpop.f32.mrf.mxu0
        %v1825 = vadd.f32 0.0, %v1824
        %v1826 = vpop.f32.mrf.mxu0
        %1827 = vmatprep.mubr.bf16.mxu0 %v1758
        %1828 = vmatmul.mubr.bf16.gmra.mxu0 %v1757
        %v1829 = vpop.f32.mrf.mxu0
        %v1830 = vadd.f32 0.0, %v1829
        %v1831 = vpop.f32.mrf.mxu0
        %v1832 = vpop.f32.mrf.mxu0
        %v1833 = vadd.f32 0.0, %v1832
        %v1834 = vpop.f32.mrf.mxu0
        %1835 = vmatprep.mubr.bf16.mxu0 %v1760
        %1836 = vmatmul.mubr.bf16.gmra.mxu0 %v1759
        %v1837 = vpop.f32.mrf.mxu0
        %v1838 = vadd.f32 0.0, %v1837
        %v1839 = vpop.f32.mrf.mxu0
        %v1840 = vpop.f32.mrf.mxu0
        %v1841 = vadd.f32 0.0, %v1840
        %v1842 = vpop.f32.mrf.mxu0
        %1843 = vmatprep.mubr.bf16.mxu0 %v1762
        %1844 = vmatmul.mubr.bf16.gmra.mxu0 %v1761
        %v1845 = vpop.f32.mrf.mxu0
        %v1846 = vadd.f32 0.0, %v1845
        %v1847 = vpop.f32.mrf.mxu0
        %v1848 = vpop.f32.mrf.mxu0
        %v1849 = vadd.f32 0.0, %v1848
        %v1850 = vpop.f32.mrf.mxu0
        %1851 = vmatprep.mubr.bf16.mxu0 %v1764
        %1852 = vmatmul.mubr.bf16.gmra.mxu0 %v1763
        %v1853 = vpop.f32.mrf.mxu0
        %v1854 = vadd.f32 0.0, %v1853
        %v1855 = vpop.f32.mrf.mxu0
        %v1856 = vpop.f32.mrf.mxu0
        %v1857 = vadd.f32 0.0, %v1856
        %v1858 = vpop.f32.mrf.mxu0
        %1859 = vmatprep.mubr.bf16.mxu0 %v1766
        %1860 = vmatmul.mubr.bf16.gmra.mxu0 %v1765
        %v1861 = vpop.f32.mrf.mxu0
        %v1862 = vadd.f32 0.0, %v1861
        %v1863 = vpop.f32.mrf.mxu0
        %v1864 = vpop.f32.mrf.mxu0
        %v1865 = vadd.f32 0.0, %v1864
        %v1866 = vpop.f32.mrf.mxu0
        %1867 = vmatprep.mubr.bf16.mxu0 %v1768
        %1868 = vmatmul.mubr.bf16.gmra.mxu0 %v1767
        %v1869 = vpop.f32.mrf.mxu0
        %v1870 = vadd.f32 0.0, %v1869
        %v1871 = vpop.f32.mrf.mxu0
        %v1872 = vpop.f32.mrf.mxu0
        %v1873 = vadd.f32 0.0, %v1872
        %v1874 = vpop.f32.mrf.mxu0
        %1875 = vmatprep.mubr.bf16.mxu0 %v1770
        %1876 = vmatmul.mubr.bf16.gmra.mxu0 %v1769
        %v1877 = vpop.f32.mrf.mxu0
        %v1878 = vadd.f32 0.0, %v1877
        %v1879 = vpop.f32.mrf.mxu0
        %v1880 = vpop.f32.mrf.mxu0
        %v1881 = vadd.f32 0.0, %v1880
        %v1882 = vpop.f32.mrf.mxu0
        %1883 = vdwg.mxu0
        %v1884 = vmax.f32 %v1822, %v1838
        %v1885 = vmax.f32 %v1825, %v1841
        %v1886 = vmax.f32 %v1830, %v1846
        %v1887 = vmax.f32 %v1833, %v1849
        %v1888 = vmax.f32 %v1884, %v1854
        %v1889 = vmax.f32 %v1885, %v1857
        %v1890 = vmax.f32 %v1886, %v1862
        %v1891 = vmax.f32 %v1887, %v1865
        %v1892 = vmax.f32 %v1888, %v1870
        %v1893 = vmax.f32 %v1889, %v1873
        %v1894 = vmax.f32 %v1890, %v1878
        %v1895 = vmax.f32 %v1891, %v1881
        %v1896 = vmax.f32 %v1892, %v1893
        %v1897 = vmax.f32 %v1894, %v1895
        %v1898 = vmax.f32 %v1896, %v1897
        %v1899 = vrot.slane %v1898, 4
        %v1900 = vmax.f32 %v1898, %v1899
        %v1901 = vrot.slane %v1900, 2
        %v1902 = vmax.f32 %v1900, %v1901
        %v1903 = vrot.slane %v1902, 1
        %v1904 = vmax.f32 %v1902, %v1903
        %v1905 = vsub.f32 %v1822, %v1904
        %v1906 = vsub.f32 %v1825, %v1904
        %v1907 = vsub.f32 %v1830, %v1904
        %v1908 = vsub.f32 %v1833, %v1904
        %v1909 = vsub.f32 %v1838, %v1904
        %v1910 = vsub.f32 %v1841, %v1904
        %v1911 = vsub.f32 %v1846, %v1904
        %v1912 = vsub.f32 %v1849, %v1904
        %v1913 = vsub.f32 %v1854, %v1904
        %v1914 = vsub.f32 %v1857, %v1904
        %v1915 = vsub.f32 %v1862, %v1904
        %v1916 = vsub.f32 %v1865, %v1904
        %v1917 = vsub.f32 %v1870, %v1904
        %v1918 = vsub.f32 %v1873, %v1904
        %v1919 = vsub.f32 %v1878, %v1904
        %v1920 = vsub.f32 %v1881, %v1904
        %v1921 = vmul.f32 %v1905, 1.442695
        %v1922 = vpow.pop %v1921
        %v1923 = vmul.f32 %v1906, 1.442695
        %v1924 = vpow.pop %v1923
        %v1925 = vmul.f32 %v1907, 1.442695
        %v1926 = vpow.pop %v1925
        %v1927 = vmul.f32 %v1908, 1.442695
        %v1928 = vpow.pop %v1927
        %v1929 = vmul.f32 %v1909, 1.442695
        %v1930 = vpow.pop %v1929
        %v1931 = vmul.f32 %v1910, 1.442695
        %v1932 = vpow.pop %v1931
        %v1933 = vmul.f32 %v1911, 1.442695
        %v1934 = vpow.pop %v1933
        %v1935 = vmul.f32 %v1912, 1.442695
        %v1936 = vpow.pop %v1935
        %v1937 = vmul.f32 %v1913, 1.442695
        %v1938 = vpow.pop %v1937
        %v1939 = vmul.f32 %v1914, 1.442695
        %v1940 = vpow.pop %v1939
        %v1941 = vmul.f32 %v1915, 1.442695
        %v1942 = vpow.pop %v1941
        %v1943 = vmul.f32 %v1916, 1.442695
        %v1944 = vpow.pop %v1943
        %v1945 = vmul.f32 %v1917, 1.442695
        %v1946 = vpow.pop %v1945
        %v1947 = vmul.f32 %v1918, 1.442695
        %v1948 = vpow.pop %v1947
        %v1949 = vmul.f32 %v1919, 1.442695
        %v1950 = vpow.pop %v1949
        %v1951 = vmul.f32 %v1920, 1.442695
        %v1952 = vpow.pop %v1951
        %v1953 = vadd.f32 %v1922, %v1924
        %v1954 = vadd.f32 %v1953, %v1926
        %v1955 = vadd.f32 %v1954, %v1928
        %v1956 = vadd.f32 %v1955, %v1930
        %v1957 = vadd.f32 %v1956, %v1932
        %v1958 = vadd.f32 %v1957, %v1934
        %v1959 = vadd.f32 %v1958, %v1936
        %v1960 = vadd.f32 %v1959, %v1938
        %v1961 = vadd.f32 %v1960, %v1940
        %v1962 = vadd.f32 %v1961, %v1942
        %v1963 = vadd.f32 %v1962, %v1944
        %v1964 = vadd.f32 %v1963, %v1946
        %v1965 = vadd.f32 %v1964, %v1948
        %v1966 = vadd.f32 %v1965, %v1950
        %v1967 = vadd.f32 %v1966, %v1952
        %v1968 = vrot.slane %v1967, 4
        %v1969 = vadd.f32 %v1967, %v1968
        %v1970 = vrot.slane %v1969, 2
        %v1971 = vadd.f32 %v1969, %v1970
        %v1972 = vrot.slane %v1971, 1
        %v1973 = vadd.f32 %v1971, %v1972
        %v1974 = vrcp.pop %v1973
        %v1975 = vmul.f32 %v1922, %v1974
        %v1976 = vmul.f32 %v1924, %v1974
        %v1977 = vmul.f32 %v1926, %v1974
        %v1978 = vmul.f32 %v1928, %v1974
        %v1979 = vmul.f32 %v1930, %v1974
        %v1980 = vmul.f32 %v1932, %v1974
        %v1981 = vmul.f32 %v1934, %v1974
        %v1982 = vmul.f32 %v1936, %v1974
        %v1983 = vmul.f32 %v1938, %v1974
        %v1984 = vmul.f32 %v1940, %v1974
        %v1985 = vmul.f32 %v1942, %v1974
        %v1986 = vmul.f32 %v1944, %v1974
        %v1987 = vmul.f32 %v1946, %v1974
        %v1988 = vmul.f32 %v1948, %v1974
        %v1989 = vmul.f32 %v1950, %v1974
        %v1990 = vmul.f32 %v1952, %v1974
        %v1991 = vld [vmem:[%s188] sm:$0xff]
        %v1992 = vld [vmem:[%s188 + $0x8] sm:$0xff]
        %v1993 = vld [vmem:[%s188 + $0x10] sm:$0xff]
        %v1994 = vld [vmem:[%s188 + $0x18] sm:$0xff]
        %v1995 = vld [vmem:[%s188 + $0x20] sm:$0xff]
        %v1996 = vld [vmem:[%s188 + $0x28] sm:$0xff]
        %v1997 = vld [vmem:[%s188 + $0x30] sm:$0xff]
        %v1998 = vld [vmem:[%s188 + $0x38] sm:$0xff]
        %v1999 = vld [vmem:[%s188 + $0x40] sm:$0xff]
        %v2000 = vld [vmem:[%s188 + $0x48] sm:$0xff]
        %v2001 = vld [vmem:[%s188 + $0x50] sm:$0xff]
        %v2002 = vld [vmem:[%s188 + $0x58] sm:$0xff]
        %v2003 = vld [vmem:[%s188 + $0x60] sm:$0xff]
        %v2004 = vld [vmem:[%s188 + $0x68] sm:$0xff]
        %v2005 = vld [vmem:[%s188 + $0x70] sm:$0xff]
        %v2006 = vld [vmem:[%s188 + $0x78] sm:$0xff]
        %v2007 = vpack.c.bf16 %v1976, %v1975
        %v2008 = vpack.c.bf16 %v1978, %v1977
        %v2009 = vpack.c.bf16 %v1980, %v1979
        %v2010 = vpack.c.bf16 %v1982, %v1981
        %v2011 = vpack.c.bf16 %v1984, %v1983
        %v2012 = vpack.c.bf16 %v1986, %v1985
        %v2013 = vpack.c.bf16 %v1988, %v1987
        %v2014 = vpack.c.bf16 %v1990, %v1989
        %v2015 = vpack.c.bf16 %v1992, %v1991
        %v2016 = vpack.c.bf16 %v1994, %v1993
        %v2017 = vpack.c.bf16 %v1996, %v1995
        %v2018 = vpack.c.bf16 %v1998, %v1997
        %v2019 = vpack.c.bf16 %v2000, %v1999
        %v2020 = vpack.c.bf16 %v2002, %v2001
        %v2021 = vpack.c.bf16 %v2004, %v2003
        %v2022 = vpack.c.bf16 %v2006, %v2005
        %2023 = vmatprep.subr.bf16.mxu0 0
        %2024 = vmatpush1.bf16.msra.mxu0 %v2022
        %2025 = vmatprep.subr.bf16.mxu0 0
        %2026 = vmatpush1.bf16.msra.mxu0 %v2021
        %2027 = vmatprep.subr.bf16.mxu0 0
        %2028 = vmatpush1.bf16.msra.mxu0 %v2020
        %2029 = vmatprep.subr.bf16.mxu0 0
        %2030 = vmatpush1.bf16.msra.mxu0 %v2019
        %2031 = vmatprep.subr.bf16.mxu0 0
        %2032 = vmatpush1.bf16.msra.mxu0 %v2018
        %2033 = vmatprep.subr.bf16.mxu0 0
        %2034 = vmatpush1.bf16.msra.mxu0 %v2017
        %2035 = vmatprep.subr.bf16.mxu0 0
        %2036 = vmatpush1.bf16.msra.mxu0 %v2016
        %2037 = vmatprep.subr.bf16.mxu0 0
        %2038 = vmatpush1.bf16.msra.mxu0 %v2015
        %2039 = vmatprep.subr.bf16.mxu0 0
        %2040 = vmatpush2.bf16.msra.mxu0 0
        %2041 = vmatprep.subr.bf16.mxu0 0
        %2042 = vmatpush2.bf16.msra.mxu0 0
        %2043 = vmatprep.subr.bf16.mxu0 0
        %2044 = vmatpush2.bf16.msra.mxu0 0
        %2045 = vmatprep.subr.bf16.mxu0 0
        %2046 = vmatpush2.bf16.msra.mxu0 0
        %2047 = vmatprep.subr.bf16.mxu0 0
        %2048 = vmatpush2.bf16.msra.mxu0 0
        %2049 = vmatprep.subr.bf16.mxu0 0
        %2050 = vmatpush2.bf16.msra.mxu0 0
        %2051 = vmatprep.subr.bf16.mxu0 0
        %2052 = vmatpush2.bf16.msra.mxu0 0
        %2053 = vmatprep.subr.bf16.mxu0 0
        %2054 = vmatpush2.bf16.msra.mxu0 0
        %2055 = vmatprep.mubr.bf16.mxu0 0
        %2056 = vmatmul.mubr.bf16.gmra.mxu0 %v2007
        %v2057 = vpop.f32.mrf.mxu0
        %v2058 = vadd.f32 0.0, %v2057
        %v2059 = vpop.f32.mrf.mxu0
        %v2060 = vpop.f32.mrf.mxu0
        %v2061 = vadd.f32 0.0, %v2060
        %v2062 = vpop.f32.mrf.mxu0
        %2063 = vmatprep.mubr.bf16.mxu0 0
        %2064 = vmatmul.mubr.bf16.gmra.mxu0 %v2008
        %v2065 = vpop.f32.mrf.mxu0
        %v2066 = vadd.f32 0.0, %v2065
        %v2067 = vpop.f32.mrf.mxu0
        %v2068 = vpop.f32.mrf.mxu0
        %v2069 = vadd.f32 0.0, %v2068
        %v2070 = vpop.f32.mrf.mxu0
        %2071 = vmatprep.mubr.bf16.mxu0 0
        %2072 = vmatmul.mubr.bf16.gmra.mxu0 %v2009
        %v2073 = vpop.f32.mrf.mxu0
        %v2074 = vadd.f32 0.0, %v2073
        %v2075 = vpop.f32.mrf.mxu0
        %v2076 = vpop.f32.mrf.mxu0
        %v2077 = vadd.f32 0.0, %v2076
        %v2078 = vpop.f32.mrf.mxu0
        %2079 = vmatprep.mubr.bf16.mxu0 0
        %2080 = vmatmul.mubr.bf16.gmra.mxu0 %v2010
        %v2081 = vpop.f32.mrf.mxu0
        %v2082 = vadd.f32 0.0, %v2081
        %v2083 = vpop.f32.mrf.mxu0
        %v2084 = vpop.f32.mrf.mxu0
        %v2085 = vadd.f32 0.0, %v2084
        %v2086 = vpop.f32.mrf.mxu0
        %2087 = vmatprep.mubr.bf16.mxu0 0
        %2088 = vmatmul.mubr.bf16.gmra.mxu0 %v2011
        %v2089 = vpop.f32.mrf.mxu0
        %v2090 = vadd.f32 0.0, %v2089
        %v2091 = vpop.f32.mrf.mxu0
        %v2092 = vpop.f32.mrf.mxu0
        %v2093 = vadd.f32 0.0, %v2092
        %v2094 = vpop.f32.mrf.mxu0
        %2095 = vmatprep.mubr.bf16.mxu0 0
        %2096 = vmatmul.mubr.bf16.gmra.mxu0 %v2012
        %v2097 = vpop.f32.mrf.mxu0
        %v2098 = vadd.f32 0.0, %v2097
        %v2099 = vpop.f32.mrf.mxu0
        %v2100 = vpop.f32.mrf.mxu0
        %v2101 = vadd.f32 0.0, %v2100
        %v2102 = vpop.f32.mrf.mxu0
        %2103 = vmatprep.mubr.bf16.mxu0 0
        %2104 = vmatmul.mubr.bf16.gmra.mxu0 %v2013
        %v2105 = vpop.f32.mrf.mxu0
        %v2106 = vadd.f32 0.0, %v2105
        %v2107 = vpop.f32.mrf.mxu0
        %v2108 = vpop.f32.mrf.mxu0
        %v2109 = vadd.f32 0.0, %v2108
        %v2110 = vpop.f32.mrf.mxu0
        %2111 = vmatprep.mubr.bf16.mxu0 0
        %2112 = vmatmul.mubr.bf16.gmra.mxu0 %v2014
        %v2113 = vpop.f32.mrf.mxu0
        %v2114 = vadd.f32 0.0, %v2113
        %v2115 = vpop.f32.mrf.mxu0
        %v2116 = vpop.f32.mrf.mxu0
        %v2117 = vadd.f32 0.0, %v2116
        %v2118 = vpop.f32.mrf.mxu0
        %2119 = vdwg.mxu0
        %v2120 = vmax.f32 %v2058, %v2074
        %v2121 = vmax.f32 %v2061, %v2077
        %v2122 = vmax.f32 %v2066, %v2082
        %v2123 = vmax.f32 %v2069, %v2085
        %v2124 = vmax.f32 %v2120, %v2090
        %v2125 = vmax.f32 %v2121, %v2093
        %v2126 = vmax.f32 %v2122, %v2098
        %v2127 = vmax.f32 %v2123, %v2101
        %v2128 = vmax.f32 %v2124, %v2106
        %v2129 = vmax.f32 %v2125, %v2109
        %v2130 = vmax.f32 %v2126, %v2114
        %v2131 = vmax.f32 %v2127, %v2117
        %v2132 = vmax.f32 %v2128, %v2129
        %v2133 = vmax.f32 %v2130, %v2131
        %v2134 = vmax.f32 %v2132, %v2133
        %v2135 = vrot.slane %v2134, 4
        %v2136 = vmax.f32 %v2134, %v2135
        %v2137 = vrot.slane %v2136, 2
        %v2138 = vmax.f32 %v2136, %v2137
        %v2139 = vrot.slane %v2138, 1
        %v2140 = vmax.f32 %v2138, %v2139
        %v2141 = vsub.f32 %v2058, %v2140
        %v2142 = vsub.f32 %v2061, %v2140
        %v2143 = vsub.f32 %v2066, %v2140
        %v2144 = vsub.f32 %v2069, %v2140
        %v2145 = vsub.f32 %v2074, %v2140
        %v2146 = vsub.f32 %v2077, %v2140
        %v2147 = vsub.f32 %v2082, %v2140
        %v2148 = vsub.f32 %v2085, %v2140
        %v2149 = vsub.f32 %v2090, %v2140
        %v2150 = vsub.f32 %v2093, %v2140
        %v2151 = vsub.f32 %v2098, %v2140
        %v2152 = vsub.f32 %v2101, %v2140
        %v2153 = vsub.f32 %v2106, %v2140
        %v2154 = vsub.f32 %v2109, %v2140
        %v2155 = vsub.f32 %v2114, %v2140
        %v2156 = vsub.f32 %v2117, %v2140
        %v2157 = vmul.f32 %v2141, 1.442695
        %v2158 = vpow.pop %v2157
        %v2159 = vmul.f32 %v2142, 1.442695
        %v2160 = vpow.pop %v2159
        %v2161 = vmul.f32 %v2143, 1.442695
        %v2162 = vpow.pop %v2161
        %v2163 = vmul.f32 %v2144, 1.442695
        %v2164 = vpow.pop %v2163
        %v2165 = vmul.f32 %v2145, 1.442695
        %v2166 = vpow.pop %v2165
        %v2167 = vmul.f32 %v2146, 1.442695
        %v2168 = vpow.pop %v2167
        %v2169 = vmul.f32 %v2147, 1.442695
        %v2170 = vpow.pop %v2169
        %v2171 = vmul.f32 %v2148, 1.442695
        %v2172 = vpow.pop %v2171
        %v2173 = vmul.f32 %v2149, 1.442695
        %v2174 = vpow.pop %v2173
        %v2175 = vmul.f32 %v2150, 1.442695
        %v2176 = vpow.pop %v2175
        %v2177 = vmul.f32 %v2151, 1.442695
        %v2178 = vpow.pop %v2177
        %v2179 = vmul.f32 %v2152, 1.442695
        %v2180 = vpow.pop %v2179
        %v2181 = vmul.f32 %v2153, 1.442695
        %v2182 = vpow.pop %v2181
        %v2183 = vmul.f32 %v2154, 1.442695
        %v2184 = vpow.pop %v2183
        %v2185 = vmul.f32 %v2155, 1.442695
        %v2186 = vpow.pop %v2185
        %v2187 = vmul.f32 %v2156, 1.442695
        %v2188 = vpow.pop %v2187
        %v2189 = vadd.f32 %v2158, %v2160
        %v2190 = vadd.f32 %v2189, %v2162
        %v2191 = vadd.f32 %v2190, %v2164
        %v2192 = vadd.f32 %v2191, %v2166
        %v2193 = vadd.f32 %v2192, %v2168
        %v2194 = vadd.f32 %v2193, %v2170
        %v2195 = vadd.f32 %v2194, %v2172
        %v2196 = vadd.f32 %v2195, %v2174
        %v2197 = vadd.f32 %v2196, %v2176
        %v2198 = vadd.f32 %v2197, %v2178
        %v2199 = vadd.f32 %v2198, %v2180
        %v2200 = vadd.f32 %v2199, %v2182
        %v2201 = vadd.f32 %v2200, %v2184
        %v2202 = vadd.f32 %v2201, %v2186
        %v2203 = vadd.f32 %v2202, %v2188
        %v2204 = vrot.slane %v2203, 4
        %v2205 = vadd.f32 %v2203, %v2204
        %v2206 = vrot.slane %v2205, 2
        %v2207 = vadd.f32 %v2205, %v2206
        %v2208 = vrot.slane %v2207, 1
        %v2209 = vadd.f32 %v2207, %v2208
        %v2210 = vrcp.pop %v2209
        %v2211 = vmul.f32 %v2158, %v2210
        %v2212 = vmul.f32 %v2160, %v2210
        %v2213 = vmul.f32 %v2162, %v2210
        %v2214 = vmul.f32 %v2164, %v2210
        %v2215 = vmul.f32 %v2166, %v2210
        %v2216 = vmul.f32 %v2168, %v2210
        %v2217 = vmul.f32 %v2170, %v2210
        %v2218 = vmul.f32 %v2172, %v2210
        %v2219 = vmul.f32 %v2174, %v2210
        %v2220 = vmul.f32 %v2176, %v2210
        %v2221 = vmul.f32 %v2178, %v2210
        %v2222 = vmul.f32 %v2180, %v2210
        %v2223 = vmul.f32 %v2182, %v2210
        %v2224 = vmul.f32 %v2184, %v2210
        %v2225 = vmul.f32 %v2186, %v2210
        %v2226 = vmul.f32 %v2188, %v2210
        %v2227 = vadd.f32 %v2211, %v2212
        %v2228 = vadd.f32 %v2227, %v2213
        %v2229 = vadd.f32 %v2228, %v2214
        %v2230 = vadd.f32 %v2229, %v2215
        %v2231 = vadd.f32 %v2230, %v2216
        %v2232 = vadd.f32 %v2231, %v2217
        %v2233 = vadd.f32 %v2232, %v2218
        %v2234 = vadd.f32 %v2233, %v2219
        %v2235 = vadd.f32 %v2234, %v2220
        %v2236 = vadd.f32 %v2235, %v2221
        %v2237 = vadd.f32 %v2236, %v2222
        %v2238 = vadd.f32 %v2237, %v2223
        %v2239 = vadd.f32 %v2238, %v2224
        %v2240 = vadd.f32 %v2239, %v2225
        %v2241 = vadd.f32 %v2240, %v2226
        %v2242 = vrot.slane %v2241, 4
        %v2243 = vadd.f32 %v2241, %v2242
        %v2244 = vrot.slane %v2243, 2
        %v2245 = vadd.f32 %v2243, %v2244
        %v2246 = vrot.slane %v2245, 1
        %v2247 = vadd.f32 %v2245, %v2246
        %v2248 = vmul.f32 %v2247, 0.0078125
        %v2249 = vmul.f32 %v2248, %v1991
        %v2250 = vmul.f32 %v2248, %v1992
        %v2251 = vmul.f32 %v2248, %v1993
        %v2252 = vmul.f32 %v2248, %v1994
        %v2253 = vmul.f32 %v2248, %v1995
        %v2254 = vmul.f32 %v2248, %v1996
        %v2255 = vmul.f32 %v2248, %v1997
        %v2256 = vmul.f32 %v2248, %v1998
        %v2257 = vmul.f32 %v2248, %v1999
        %v2258 = vmul.f32 %v2248, %v2000
        %v2259 = vmul.f32 %v2248, %v2001
        %v2260 = vmul.f32 %v2248, %v2002
        %v2261 = vmul.f32 %v2248, %v2003
        %v2262 = vmul.f32 %v2248, %v2004
        %v2263 = vmul.f32 %v2248, %v2005
        %v2264 = vmul.f32 %v2248, %v2006
        %2265 = vst [vmem:[%s178] sm:$0xff] %v2249
        %2266 = vst [vmem:[%s178 + $0x8] sm:$0xff] %v2250
        %2267 = vst [vmem:[%s178 + $0x10] sm:$0xff] %v2251
        %2268 = vst [vmem:[%s178 + $0x18] sm:$0xff] %v2252
        %2269 = vst [vmem:[%s178 + $0x20] sm:$0xff] %v2253
        %2270 = vst [vmem:[%s178 + $0x28] sm:$0xff] %v2254
        %2271 = vst [vmem:[%s178 + $0x30] sm:$0xff] %v2255
        %2272 = vst [vmem:[%s178 + $0x38] sm:$0xff] %v2256
        %2273 = vst [vmem:[%s178 + $0x40] sm:$0xff] %v2257
        %2274 = vst [vmem:[%s178 + $0x48] sm:$0xff] %v2258
        %2275 = vst [vmem:[%s178 + $0x50] sm:$0xff] %v2259
        %2276 = vst [vmem:[%s178 + $0x58] sm:$0xff] %v2260
        %2277 = vst [vmem:[%s178 + $0x60] sm:$0xff] %v2261
        %2278 = vst [vmem:[%s178 + $0x68] sm:$0xff] %v2262
        %2279 = vst [vmem:[%s178 + $0x70] sm:$0xff] %v2263
        %2280 = vst [vmem:[%s178 + $0x78] sm:$0xff] %v2264
        %s2281 = sand.u32 %s98, 1
        %s2282 = scalar_lea.sflag [#allocation5], %s2281
        %s2283 = sand.u32 %s98, 1
        %s2284 = smul.addr %s2283, 128
        %s2285 = scalar_lea.vmem [#allocation4], %s2284
        // Predicated region
        $region33: #{word_atten.1} parent=31 // pred_check
          %p2286 = pneg %p108
        $region34: #{word_atten.1} parent=31 // pred_check_branch
          %2288 = sbr.rel (%p2286) target = $region36
        $region35: #{word_atten.1} parent=31 // pred_region
          %s2290 = ssub.s32 2048, 2048
          %2291 = vsyncadd %s2282, %s2290
          %s2292 = smul.addr %s17, 16
          %s2293 = smul.addr %s2292, 128
          %s2294 = scalar_lea.hbm %s3, %s2293
          %s2295 = sshll.u32 %s2285, 4
          %s2296 = int_to_ptr.vmem [resolvable:$true] %s2295
          %2301 = dma.vmem_to_hbm [thread:$0]  %s2296, 2048, %s2294, %s2282, 128, 128, 8
        $region36: #{word_atten.1} parent=31 // pred_fallthru
          _
      $region32: #{word_atten.1} parent=5 // pred_fallthru
        _
      %p2302 = scmp.le.s32.totalorder 2, %s12
      // Predicated region
      $region37: #{word_atten.1} parent=5 // pred_check
        %p2303 = pneg %p2302
      $region38: #{word_atten.1} parent=5 // pred_check_branch
        %2305 = sbr.rel (%p2303) target = $region40
      $region39: #{word_atten.1} parent=5 // pred_region
        %s2306 = ssub.s32 %s12, 2
        // Predicated region
        $region41: #{word_atten.1} parent=39 // pred_check
          %p2307 = pneg %p114
        $region42: #{word_atten.1} parent=39 // pred_check_branch
          %2309 = sbr.rel (%p2307) target = $region44
        $region43: #{word_atten.1} parent=39 // pred_region
          %s2310 = sand.u32 %s99, 1
          %s2311 = scalar_lea.sflag [#allocation5], %s2310
          %s2312 = sand.u32 %s99, 1
          %s2313 = smul.addr %s2312, 128
          %s2314 = scalar_lea.vmem [#allocation4], %s2313
          %2315 = dma.done %s2311, 2048
        $region44: #{word_atten.1} parent=39 // pred_fallthru
          _
      $region40: #{word_atten.1} parent=5 // pred_fallthru
        _
    $region6: #{word_atten.1} parent=1 // loop_footer
      %s16 = sadd.s32 1, %s12
    $region7: #{word_atten.1} parent=1 // loop_footer_branch
      %11 = sbr.rel target = $region3
    $region8: #{word_atten.1} parent=1 // loop_exit
      _
    %2316 = vsyncpa [#allocation5], 1
    %s2317 = scalar_lea.sflag [#allocation5], 1
    %2318 = vsyncpa %s2317, 1

</llo_original>
